<compile_context>
chip_gen: v6e
topology: v6e:2x2x1
jax: 0.10.0
libtpu: 0.0.40
codegen_flags: <defaults>
</compile_context>

<pallas_src>
import math
from functools import partial

import jax
import jax.numpy as jnp
from jax.experimental import pallas as pl
from jax.experimental.pallas import tpu as pltpu


def _round_up(x, m):
    return (x + m - 1) // m * m


def _bilinear_kernel(x_ref, y_ref, w_ref, o_ref, *, dy, o_pad, bias_y,
                     compute_dtype):
    # x_ref: (TM, dx_aug)  x with the bias_x ones column already appended
    # y_ref: (TM, dy)      raw y features (bias_y handled via the weight slab)
    # w_ref: (dx_aug, dy_aug * o_pad), w[i, j*o_pad + o] = W[o, i, j] (bf16)
    # o_ref: (TM, o_pad)
    tm = x_ref.shape[0]

    # --- first contraction (over i) on the MXU, bf16 x bf16 -> f32 acc ---
    #   xw[n, j*o_pad + o] = sum_i x_aug[n, i] * W[o, i, j]
    x = x_ref[...].astype(compute_dtype)
    xw = jnp.dot(x, w_ref[...], preferred_element_type=jnp.float32)

    y = y_ref[...].astype(jnp.float32)

    # --- second contraction (over j): lane-dense accumulation loop ---
    # Each term is a static, 128-aligned lane slice of xw scaled by one y
    # column broadcast across lanes; everything stays 2-D with TM on sublanes
    # and o_pad on lanes (no 3-D reshape, no cross-sublane reduce).
    if bias_y:
        acc = xw[:, dy * o_pad:(dy + 1) * o_pad]        # j == dy slab, y_j == 1
    else:
        acc = jnp.zeros((tm, o_pad), jnp.float32)
    for j in range(dy):
        acc = acc + xw[:, j * o_pad:(j + 1) * o_pad] * y[:, j:j + 1]

    o_ref[...] = acc.astype(o_ref.dtype)


class BilinearPallas:
    """JAX/Pallas port of the dl4dp Bilinear module (forward pass)."""

    def __init__(self, input_dim, output_dim, bias_x=True, bias_y=True,
                 key=None, compute_dtype=jnp.bfloat16):
        self.input_dim = input_dim
        self.output_dim = output_dim
        self.bias_x = bias_x
        self.bias_y = bias_y
        self.compute_dtype = jnp.dtype(compute_dtype)

        dx_aug = input_dim + int(bias_x)
        dy_aug = input_dim + int(bias_y)

        # Deterministic init mirroring torch xavier_uniform_ with
        # gain = calculate_gain('leaky_relu', 0.1) = sqrt(2 / (1 + 0.1**2)).
        gain = math.sqrt(2.0 / (1.0 + 0.1 ** 2))
        fan_in = dx_aug * dy_aug       # size(1) * receptive_field
        fan_out = output_dim * dy_aug  # size(0) * receptive_field
        bound = gain * math.sqrt(6.0 / (fan_in + fan_out))
        if key is None:
            key = jax.random.PRNGKey(42)
        # Torch-layout parameter (output_dim, dx_aug, dy_aug), kept in f32 as
        # the reference parameter.
        self.weight = jax.random.uniform(
            key, (output_dim, dx_aug, dy_aug), dtype=jnp.float32,
            minval=-bound, maxval=bound)

        # Lane-dense packed weight for the kernel, stored in the compute dtype:
        #   w_packed[i, j * o_pad + o] = weight[o, i, j], o zero-padded to 128.
        self.o_pad = _round_up(max(output_dim, 1), 128)
        w = jnp.transpose(self.weight, (1, 2, 0))                 # (dx_aug, dy_aug, O)
        w = jnp.pad(w, ((0, 0), (0, 0), (0, self.o_pad - output_dim)))
        self.w_packed = w.reshape(dx_aug, dy_aug * self.o_pad).astype(
            self.compute_dtype)

    def __call__(self, x, y, *, block_rows=512):
        lead = x.shape[:-1]
        dx = x.shape[-1]
        dy = y.shape[-1]
        o = self.output_dim
        o_pad = self.o_pad
        dx_aug = dx + int(self.bias_x)
        dy_aug = dy + int(self.bias_y)
        k2 = dy_aug * o_pad

        xf = x.reshape(-1, dx)
        yf = y.reshape(-1, dy)
        n = xf.shape[0]

        # Fold bias_x into the matmul: append the ones column host-side so the
        # MXU contraction runs over dx_aug rows (no in-kernel broadcast add).
        if self.bias_x:
            xf = jnp.concatenate(
                [xf, jnp.ones((n, 1), xf.dtype)], axis=-1)

        # Row alignment: 8 sublanes for 4-byte inputs, 16 for bf16, 32 for int8.
        itemsize = min(jnp.dtype(xf.dtype).itemsize, jnp.dtype(yf.dtype).itemsize)
        row_align = 8 * max(1, 4 // max(itemsize, 1))
        tm = _round_up(min(block_rows, max(n, 1)), row_align)
        n_pad = _round_up(max(n, 1), tm)
        if n_pad != n:
            xf = jnp.pad(xf, ((0, n_pad - n), (0, 0)))
            yf = jnp.pad(yf, ((0, n_pad - n), (0, 0)))

        # Output in f32 (accumulator precision); bf16 output is an optional
        # further HBM-traffic saving if downstream precision allows.
        out_dtype = jnp.result_type(x.dtype, y.dtype, jnp.float32)

        kernel = partial(_bilinear_kernel, dy=dy, o_pad=o_pad,
                         bias_y=self.bias_y, compute_dtype=self.compute_dtype)

        cost = pl.CostEstimate(
            flops=2 * n_pad * (dx_aug * k2 + dy_aug * o_pad),
            transcendentals=0,
            bytes_accessed=(xf.size * xf.dtype.itemsize
                            + yf.size * yf.dtype.itemsize
                            + self.w_packed.size * self.w_packed.dtype.itemsize
                            + n_pad * o_pad * jnp.dtype(out_dtype).itemsize),
        )

        out = pl.pallas_call(
            kernel,
            out_shape=jax.ShapeDtypeStruct((n_pad, o_pad), out_dtype),
            grid=(n_pad // tm,),
            in_specs=[
                pl.BlockSpec((tm, dx_aug), lambda i: (i, 0)),
                pl.BlockSpec((tm, dy), lambda i: (i, 0)),
                # Constant index_map: weight fetched once, VMEM-resident across
                # the whole batch axis.
                pl.BlockSpec((dx_aug, k2), lambda i: (0, 0)),
            ],
            out_specs=pl.BlockSpec((tm, o_pad), lambda i: (i, 0)),
            compiler_params=pltpu.CompilerParams(
                dimension_semantics=("parallel",),
                # Covers the larger default tile on v5e's 16 MiB scoped default;
                # no-op on v6e/v7x (their scoped default is already 32 MiB).
                vmem_limit_bytes=32 * 1024 * 1024),
            cost_estimate=cost,
        )(xf, yf, self.w_packed)

        # Drop batch/output padding and restore leading dims.
        return out[:n, :o].reshape(lead + (o,))


def _add_ones(a):
    return jnp.concatenate([a, jnp.ones(a.shape[:-1] + (1,), a.dtype)], axis=-1)


if __name__ == "__main__":
    input_dim = 32
    output_dim = 4
    batch = 40           # with block_rows=16 -> 3-step grid (exercises padding)

    key = jax.random.PRNGKey(0)
    kx, ky, kw = jax.random.split(key, 3)
    x = jax.random.normal(kx, (batch, input_dim), dtype=jnp.float32)
    y = jax.random.normal(ky, (batch, input_dim), dtype=jnp.float32)

    mod = BilinearPallas(input_dim, output_dim, bias_x=True, bias_y=True, key=kw)

    out = jax.block_until_ready(mod(x, y, block_rows=16))
    assert out.shape == (batch, output_dim)

    # Pure-JAX references (match torch.nn.functional.bilinear on augmented inputs).
    xa, ya = _add_ones(x), _add_ones(y)

    # Strict check: same bf16-quantized x / W that feed the MXU, f32 accumulate.
    w_q = mod.weight.astype(jnp.bfloat16).astype(jnp.float32)
    ref_q = jnp.einsum("ni,oij,nj->no",
                       xa.astype(jnp.bfloat16).astype(jnp.float32), w_q, ya,
                       precision=jax.lax.Precision.HIGHEST)
    err_q = float(jnp.max(jnp.abs(out - ref_q)))
    assert jnp.allclose(out, ref_q, atol=1e-3, rtol=1e-3), err_q

    # Loose sanity check against the full-f32 weights (bounds bf16 quantization noise).
    ref_f32 = jnp.einsum("ni,oij,nj->no", xa, mod.weight, ya,
                         precision=jax.lax.Precision.HIGHEST)
    err_f = float(jnp.max(jnp.abs(out - ref_f32)))
    assert jnp.allclose(out, ref_f32, atol=5e-2, rtol=5e-2), err_f

    print("KERNEL_OK")
</pallas_src>

<mosaic_0001>
module attributes {stable_mosaic.version = 11 : i64} {
  func.func @_bilinear_kernel(%arg0: i32, %arg1: memref<16x33xf32, #tpu.memory_space<vmem>>, %arg2: memref<16x32xf32, #tpu.memory_space<vmem>>, %arg3: memref<33x4224xbf16, #tpu.memory_space<vmem>>, %arg4: memref<16x128xf32, #tpu.memory_space<vmem>>) attributes {dimension_semantics = [#tpu.dimension_semantics<parallel>], iteration_bounds = array<i64: 3>, scalar_prefetch = 0 : i64, scratch_operands = 0 : i64, tpu.core_type = #tpu.core_type<tc>, window_params = [{transform_indices = @transform_0, window_bounds = array<i64: 16, 33>}, {transform_indices = @transform_1, window_bounds = array<i64: 16, 32>}, {pipeline_mode = #tpu.pipeline_mode<synchronous>, transform_indices = @transform_2, window_bounds = array<i64: 33, 4224>}, {transform_indices = @transform_3, window_bounds = array<i64: 16, 128>}]} {
    %c0 = arith.constant 0 : index
    %c0_0 = arith.constant 0 : index
    %0 = vector.load %arg1[%c0, %c0_0] : memref<16x33xf32, #tpu.memory_space<vmem>>, vector<16x33xf32>
    %1 = arith.truncf %0 : vector<16x33xf32> to vector<16x33xbf16>
    %c0_1 = arith.constant 0 : index
    %c0_2 = arith.constant 0 : index
    %2 = vector.load %arg3[%c0_1, %c0_2] : memref<33x4224xbf16, #tpu.memory_space<vmem>>, vector<33x4224xbf16>
    %cst = arith.constant dense<0.000000e+00> : vector<16x4224xf32>
    %3 = tpu.matmul %1, %2, %cst {dimension_numbers = #tpu.dot_dimension_numbers<[1], [0], [0], [1], [0, 0, 1, 1], [], []>} : vector<16x33xbf16>, vector<33x4224xbf16>, vector<16x4224xf32> -> vector<16x4224xf32>
    %c0_3 = arith.constant 0 : index
    %c0_4 = arith.constant 0 : index
    %4 = vector.load %arg2[%c0_3, %c0_4] : memref<16x32xf32, #tpu.memory_space<vmem>>, vector<16x32xf32>
    %5 = vector.extract_strided_slice %3 {offsets = [0, 4096], sizes = [16, 128], strides = [1, 1]} : vector<16x4224xf32> to vector<16x128xf32>
    %6 = vector.extract_strided_slice %3 {offsets = [0, 0], sizes = [16, 128], strides = [1, 1]} : vector<16x4224xf32> to vector<16x128xf32>
    %7 = vector.extract_strided_slice %4 {offsets = [0, 0], sizes = [16, 1], strides = [1, 1]} : vector<16x32xf32> to vector<16x1xf32>
    %8 = vector.broadcast %7 : vector<16x1xf32> to vector<16x128xf32>
    %9 = arith.mulf %6, %8 : vector<16x128xf32>
    %10 = arith.addf %5, %9 : vector<16x128xf32>
    %11 = vector.extract_strided_slice %3 {offsets = [0, 128], sizes = [16, 128], strides = [1, 1]} : vector<16x4224xf32> to vector<16x128xf32>
    %12 = vector.extract_strided_slice %4 {offsets = [0, 1], sizes = [16, 1], strides = [1, 1]} : vector<16x32xf32> to vector<16x1xf32>
    %13 = vector.broadcast %12 : vector<16x1xf32> to vector<16x128xf32>
    %14 = arith.mulf %11, %13 : vector<16x128xf32>
    %15 = arith.addf %10, %14 : vector<16x128xf32>
    %16 = vector.extract_strided_slice %3 {offsets = [0, 256], sizes = [16, 128], strides = [1, 1]} : vector<16x4224xf32> to vector<16x128xf32>
    %17 = vector.extract_strided_slice %4 {offsets = [0, 2], sizes = [16, 1], strides = [1, 1]} : vector<16x32xf32> to vector<16x1xf32>
    %18 = vector.broadcast %17 : vector<16x1xf32> to vector<16x128xf32>
    %19 = arith.mulf %16, %18 : vector<16x128xf32>
    %20 = arith.addf %15, %19 : vector<16x128xf32>
    %21 = vector.extract_strided_slice %3 {offsets = [0, 384], sizes = [16, 128], strides = [1, 1]} : vector<16x4224xf32> to vector<16x128xf32>
    %22 = vector.extract_strided_slice %4 {offsets = [0, 3], sizes = [16, 1], strides = [1, 1]} : vector<16x32xf32> to vector<16x1xf32>
    %23 = vector.broadcast %22 : vector<16x1xf32> to vector<16x128xf32>
    %24 = arith.mulf %21, %23 : vector<16x128xf32>
    %25 = arith.addf %20, %24 : vector<16x128xf32>
    %26 = vector.extract_strided_slice %3 {offsets = [0, 512], sizes = [16, 128], strides = [1, 1]} : vector<16x4224xf32> to vector<16x128xf32>
    %27 = vector.extract_strided_slice %4 {offsets = [0, 4], sizes = [16, 1], strides = [1, 1]} : vector<16x32xf32> to vector<16x1xf32>
    %28 = vector.broadcast %27 : vector<16x1xf32> to vector<16x128xf32>
    %29 = arith.mulf %26, %28 : vector<16x128xf32>
    %30 = arith.addf %25, %29 : vector<16x128xf32>
    %31 = vector.extract_strided_slice %3 {offsets = [0, 640], sizes = [16, 128], strides = [1, 1]} : vector<16x4224xf32> to vector<16x128xf32>
    %32 = vector.extract_strided_slice %4 {offsets = [0, 5], sizes = [16, 1], strides = [1, 1]} : vector<16x32xf32> to vector<16x1xf32>
    %33 = vector.broadcast %32 : vector<16x1xf32> to vector<16x128xf32>
    %34 = arith.mulf %31, %33 : vector<16x128xf32>
    %35 = arith.addf %30, %34 : vector<16x128xf32>
    %36 = vector.extract_strided_slice %3 {offsets = [0, 768], sizes = [16, 128], strides = [1, 1]} : vector<16x4224xf32> to vector<16x128xf32>
    %37 = vector.extract_strided_slice %4 {offsets = [0, 6], sizes = [16, 1], strides = [1, 1]} : vector<16x32xf32> to vector<16x1xf32>
    %38 = vector.broadcast %37 : vector<16x1xf32> to vector<16x128xf32>
    %39 = arith.mulf %36, %38 : vector<16x128xf32>
    %40 = arith.addf %35, %39 : vector<16x128xf32>
    %41 = vector.extract_strided_slice %3 {offsets = [0, 896], sizes = [16, 128], strides = [1, 1]} : vector<16x4224xf32> to vector<16x128xf32>
    %42 = vector.extract_strided_slice %4 {offsets = [0, 7], sizes = [16, 1], strides = [1, 1]} : vector<16x32xf32> to vector<16x1xf32>
    %43 = vector.broadcast %42 : vector<16x1xf32> to vector<16x128xf32>
    %44 = arith.mulf %41, %43 : vector<16x128xf32>
    %45 = arith.addf %40, %44 : vector<16x128xf32>
    %46 = vector.extract_strided_slice %3 {offsets = [0, 1024], sizes = [16, 128], strides = [1, 1]} : vector<16x4224xf32> to vector<16x128xf32>
    %47 = vector.extract_strided_slice %4 {offsets = [0, 8], sizes = [16, 1], strides = [1, 1]} : vector<16x32xf32> to vector<16x1xf32>
    %48 = vector.broadcast %47 : vector<16x1xf32> to vector<16x128xf32>
    %49 = arith.mulf %46, %48 : vector<16x128xf32>
    %50 = arith.addf %45, %49 : vector<16x128xf32>
    %51 = vector.extract_strided_slice %3 {offsets = [0, 1152], sizes = [16, 128], strides = [1, 1]} : vector<16x4224xf32> to vector<16x128xf32>
    %52 = vector.extract_strided_slice %4 {offsets = [0, 9], sizes = [16, 1], strides = [1, 1]} : vector<16x32xf32> to vector<16x1xf32>
    %53 = vector.broadcast %52 : vector<16x1xf32> to vector<16x128xf32>
    %54 = arith.mulf %51, %53 : vector<16x128xf32>
    %55 = arith.addf %50, %54 : vector<16x128xf32>
    %56 = vector.extract_strided_slice %3 {offsets = [0, 1280], sizes = [16, 128], strides = [1, 1]} : vector<16x4224xf32> to vector<16x128xf32>
    %57 = vector.extract_strided_slice %4 {offsets = [0, 10], sizes = [16, 1], strides = [1, 1]} : vector<16x32xf32> to vector<16x1xf32>
    %58 = vector.broadcast %57 : vector<16x1xf32> to vector<16x128xf32>
    %59 = arith.mulf %56, %58 : vector<16x128xf32>
    %60 = arith.addf %55, %59 : vector<16x128xf32>
    %61 = vector.extract_strided_slice %3 {offsets = [0, 1408], sizes = [16, 128], strides = [1, 1]} : vector<16x4224xf32> to vector<16x128xf32>
    %62 = vector.extract_strided_slice %4 {offsets = [0, 11], sizes = [16, 1], strides = [1, 1]} : vector<16x32xf32> to vector<16x1xf32>
    %63 = vector.broadcast %62 : vector<16x1xf32> to vector<16x128xf32>
    %64 = arith.mulf %61, %63 : vector<16x128xf32>
    %65 = arith.addf %60, %64 : vector<16x128xf32>
    %66 = vector.extract_strided_slice %3 {offsets = [0, 1536], sizes = [16, 128], strides = [1, 1]} : vector<16x4224xf32> to vector<16x128xf32>
    %67 = vector.extract_strided_slice %4 {offsets = [0, 12], sizes = [16, 1], strides = [1, 1]} : vector<16x32xf32> to vector<16x1xf32>
    %68 = vector.broadcast %67 : vector<16x1xf32> to vector<16x128xf32>
    %69 = arith.mulf %66, %68 : vector<16x128xf32>
    %70 = arith.addf %65, %69 : vector<16x128xf32>
    %71 = vector.extract_strided_slice %3 {offsets = [0, 1664], sizes = [16, 128], strides = [1, 1]} : vector<16x4224xf32> to vector<16x128xf32>
    %72 = vector.extract_strided_slice %4 {offsets = [0, 13], sizes = [16, 1], strides = [1, 1]} : vector<16x32xf32> to vector<16x1xf32>
    %73 = vector.broadcast %72 : vector<16x1xf32> to vector<16x128xf32>
    %74 = arith.mulf %71, %73 : vector<16x128xf32>
    %75 = arith.addf %70, %74 : vector<16x128xf32>
    %76 = vector.extract_strided_slice %3 {offsets = [0, 1792], sizes = [16, 128], strides = [1, 1]} : vector<16x4224xf32> to vector<16x128xf32>
    %77 = vector.extract_strided_slice %4 {offsets = [0, 14], sizes = [16, 1], strides = [1, 1]} : vector<16x32xf32> to vector<16x1xf32>
    %78 = vector.broadcast %77 : vector<16x1xf32> to vector<16x128xf32>
    %79 = arith.mulf %76, %78 : vector<16x128xf32>
    %80 = arith.addf %75, %79 : vector<16x128xf32>
    %81 = vector.extract_strided_slice %3 {offsets = [0, 1920], sizes = [16, 128], strides = [1, 1]} : vector<16x4224xf32> to vector<16x128xf32>
    %82 = vector.extract_strided_slice %4 {offsets = [0, 15], sizes = [16, 1], strides = [1, 1]} : vector<16x32xf32> to vector<16x1xf32>
    %83 = vector.broadcast %82 : vector<16x1xf32> to vector<16x128xf32>
    %84 = arith.mulf %81, %83 : vector<16x128xf32>
    %85 = arith.addf %80, %84 : vector<16x128xf32>
    %86 = vector.extract_strided_slice %3 {offsets = [0, 2048], sizes = [16, 128], strides = [1, 1]} : vector<16x4224xf32> to vector<16x128xf32>
    %87 = vector.extract_strided_slice %4 {offsets = [0, 16], sizes = [16, 1], strides = [1, 1]} : vector<16x32xf32> to vector<16x1xf32>
    %88 = vector.broadcast %87 : vector<16x1xf32> to vector<16x128xf32>
    %89 = arith.mulf %86, %88 : vector<16x128xf32>
    %90 = arith.addf %85, %89 : vector<16x128xf32>
    %91 = vector.extract_strided_slice %3 {offsets = [0, 2176], sizes = [16, 128], strides = [1, 1]} : vector<16x4224xf32> to vector<16x128xf32>
    %92 = vector.extract_strided_slice %4 {offsets = [0, 17], sizes = [16, 1], strides = [1, 1]} : vector<16x32xf32> to vector<16x1xf32>
    %93 = vector.broadcast %92 : vector<16x1xf32> to vector<16x128xf32>
    %94 = arith.mulf %91, %93 : vector<16x128xf32>
    %95 = arith.addf %90, %94 : vector<16x128xf32>
    %96 = vector.extract_strided_slice %3 {offsets = [0, 2304], sizes = [16, 128], strides = [1, 1]} : vector<16x4224xf32> to vector<16x128xf32>
    %97 = vector.extract_strided_slice %4 {offsets = [0, 18], sizes = [16, 1], strides = [1, 1]} : vector<16x32xf32> to vector<16x1xf32>
    %98 = vector.broadcast %97 : vector<16x1xf32> to vector<16x128xf32>
    %99 = arith.mulf %96, %98 : vector<16x128xf32>
    %100 = arith.addf %95, %99 : vector<16x128xf32>
    %101 = vector.extract_strided_slice %3 {offsets = [0, 2432], sizes = [16, 128], strides = [1, 1]} : vector<16x4224xf32> to vector<16x128xf32>
    %102 = vector.extract_strided_slice %4 {offsets = [0, 19], sizes = [16, 1], strides = [1, 1]} : vector<16x32xf32> to vector<16x1xf32>
    %103 = vector.broadcast %102 : vector<16x1xf32> to vector<16x128xf32>
    %104 = arith.mulf %101, %103 : vector<16x128xf32>
    %105 = arith.addf %100, %104 : vector<16x128xf32>
    %106 = vector.extract_strided_slice %3 {offsets = [0, 2560], sizes = [16, 128], strides = [1, 1]} : vector<16x4224xf32> to vector<16x128xf32>
    %107 = vector.extract_strided_slice %4 {offsets = [0, 20], sizes = [16, 1], strides = [1, 1]} : vector<16x32xf32> to vector<16x1xf32>
    %108 = vector.broadcast %107 : vector<16x1xf32> to vector<16x128xf32>
    %109 = arith.mulf %106, %108 : vector<16x128xf32>
    %110 = arith.addf %105, %109 : vector<16x128xf32>
    %111 = vector.extract_strided_slice %3 {offsets = [0, 2688], sizes = [16, 128], strides = [1, 1]} : vector<16x4224xf32> to vector<16x128xf32>
    %112 = vector.extract_strided_slice %4 {offsets = [0, 21], sizes = [16, 1], strides = [1, 1]} : vector<16x32xf32> to vector<16x1xf32>
    %113 = vector.broadcast %112 : vector<16x1xf32> to vector<16x128xf32>
    %114 = arith.mulf %111, %113 : vector<16x128xf32>
    %115 = arith.addf %110, %114 : vector<16x128xf32>
    %116 = vector.extract_strided_slice %3 {offsets = [0, 2816], sizes = [16, 128], strides = [1, 1]} : vector<16x4224xf32> to vector<16x128xf32>
    %117 = vector.extract_strided_slice %4 {offsets = [0, 22], sizes = [16, 1], strides = [1, 1]} : vector<16x32xf32> to vector<16x1xf32>
    %118 = vector.broadcast %117 : vector<16x1xf32> to vector<16x128xf32>
    %119 = arith.mulf %116, %118 : vector<16x128xf32>
    %120 = arith.addf %115, %119 : vector<16x128xf32>
    %121 = vector.extract_strided_slice %3 {offsets = [0, 2944], sizes = [16, 128], strides = [1, 1]} : vector<16x4224xf32> to vector<16x128xf32>
    %122 = vector.extract_strided_slice %4 {offsets = [0, 23], sizes = [16, 1], strides = [1, 1]} : vector<16x32xf32> to vector<16x1xf32>
    %123 = vector.broadcast %122 : vector<16x1xf32> to vector<16x128xf32>
    %124 = arith.mulf %121, %123 : vector<16x128xf32>
    %125 = arith.addf %120, %124 : vector<16x128xf32>
    %126 = vector.extract_strided_slice %3 {offsets = [0, 3072], sizes = [16, 128], strides = [1, 1]} : vector<16x4224xf32> to vector<16x128xf32>
    %127 = vector.extract_strided_slice %4 {offsets = [0, 24], sizes = [16, 1], strides = [1, 1]} : vector<16x32xf32> to vector<16x1xf32>
    %128 = vector.broadcast %127 : vector<16x1xf32> to vector<16x128xf32>
    %129 = arith.mulf %126, %128 : vector<16x128xf32>
    %130 = arith.addf %125, %129 : vector<16x128xf32>
    %131 = vector.extract_strided_slice %3 {offsets = [0, 3200], sizes = [16, 128], strides = [1, 1]} : vector<16x4224xf32> to vector<16x128xf32>
    %132 = vector.extract_strided_slice %4 {offsets = [0, 25], sizes = [16, 1], strides = [1, 1]} : vector<16x32xf32> to vector<16x1xf32>
    %133 = vector.broadcast %132 : vector<16x1xf32> to vector<16x128xf32>
    %134 = arith.mulf %131, %133 : vector<16x128xf32>
    %135 = arith.addf %130, %134 : vector<16x128xf32>
    %136 = vector.extract_strided_slice %3 {offsets = [0, 3328], sizes = [16, 128], strides = [1, 1]} : vector<16x4224xf32> to vector<16x128xf32>
    %137 = vector.extract_strided_slice %4 {offsets = [0, 26], sizes = [16, 1], strides = [1, 1]} : vector<16x32xf32> to vector<16x1xf32>
    %138 = vector.broadcast %137 : vector<16x1xf32> to vector<16x128xf32>
    %139 = arith.mulf %136, %138 : vector<16x128xf32>
    %140 = arith.addf %135, %139 : vector<16x128xf32>
    %141 = vector.extract_strided_slice %3 {offsets = [0, 3456], sizes = [16, 128], strides = [1, 1]} : vector<16x4224xf32> to vector<16x128xf32>
    %142 = vector.extract_strided_slice %4 {offsets = [0, 27], sizes = [16, 1], strides = [1, 1]} : vector<16x32xf32> to vector<16x1xf32>
    %143 = vector.broadcast %142 : vector<16x1xf32> to vector<16x128xf32>
    %144 = arith.mulf %141, %143 : vector<16x128xf32>
    %145 = arith.addf %140, %144 : vector<16x128xf32>
    %146 = vector.extract_strided_slice %3 {offsets = [0, 3584], sizes = [16, 128], strides = [1, 1]} : vector<16x4224xf32> to vector<16x128xf32>
    %147 = vector.extract_strided_slice %4 {offsets = [0, 28], sizes = [16, 1], strides = [1, 1]} : vector<16x32xf32> to vector<16x1xf32>
    %148 = vector.broadcast %147 : vector<16x1xf32> to vector<16x128xf32>
    %149 = arith.mulf %146, %148 : vector<16x128xf32>
    %150 = arith.addf %145, %149 : vector<16x128xf32>
    %151 = vector.extract_strided_slice %3 {offsets = [0, 3712], sizes = [16, 128], strides = [1, 1]} : vector<16x4224xf32> to vector<16x128xf32>
    %152 = vector.extract_strided_slice %4 {offsets = [0, 29], sizes = [16, 1], strides = [1, 1]} : vector<16x32xf32> to vector<16x1xf32>
    %153 = vector.broadcast %152 : vector<16x1xf32> to vector<16x128xf32>
    %154 = arith.mulf %151, %153 : vector<16x128xf32>
    %155 = arith.addf %150, %154 : vector<16x128xf32>
    %156 = vector.extract_strided_slice %3 {offsets = [0, 3840], sizes = [16, 128], strides = [1, 1]} : vector<16x4224xf32> to vector<16x128xf32>
    %157 = vector.extract_strided_slice %4 {offsets = [0, 30], sizes = [16, 1], strides = [1, 1]} : vector<16x32xf32> to vector<16x1xf32>
    %158 = vector.broadcast %157 : vector<16x1xf32> to vector<16x128xf32>
    %159 = arith.mulf %156, %158 : vector<16x128xf32>
    %160 = arith.addf %155, %159 : vector<16x128xf32>
    %161 = vector.extract_strided_slice %3 {offsets = [0, 3968], sizes = [16, 128], strides = [1, 1]} : vector<16x4224xf32> to vector<16x128xf32>
    %162 = vector.extract_strided_slice %4 {offsets = [0, 31], sizes = [16, 1], strides = [1, 1]} : vector<16x32xf32> to vector<16x1xf32>
    %163 = vector.broadcast %162 : vector<16x1xf32> to vector<16x128xf32>
    %164 = arith.mulf %161, %163 : vector<16x128xf32>
    %165 = arith.addf %160, %164 : vector<16x128xf32>
    %c0_5 = arith.constant 0 : index
    %c0_6 = arith.constant 0 : index
    %166 = vector.load %arg4[%c0_5, %c0_6] : memref<16x128xf32, #tpu.memory_space<vmem>>, vector<16x128xf32>
    tpu.vector_store %arg4[%c0_5, %c0_6], %165 {strides = array<i32>} : memref<16x128xf32, #tpu.memory_space<vmem>>, vector<16x128xf32>,
    return
  }
  func.func @transform_0(%arg0: i32) -> (i32, i32) {
    %c0_i32 = arith.constant 0 : i32
    %c0_i32_0 = arith.constant 0 : i32
    return %arg0, %c0_i32 : i32, i32
  }
  func.func @transform_1(%arg0: i32) -> (i32, i32) {
    %c0_i32 = arith.constant 0 : i32
    %c0_i32_0 = arith.constant 0 : i32
    return %arg0, %c0_i32 : i32, i32
  }
  func.func @transform_2(%arg0: i32) -> (i32, i32) {
    %c0_i32 = arith.constant 0 : i32
    %c0_i32_0 = arith.constant 0 : i32
    %c0_i32_1 = arith.constant 0 : i32
    return %c0_i32, %c0_i32_0 : i32, i32
  }
  func.func @transform_3(%arg0: i32) -> (i32, i32) {
    %c0_i32 = arith.constant 0 : i32
    %c0_i32_0 = arith.constant 0 : i32
    return %arg0, %c0_i32 : i32, i32
  }
}

</mosaic_0001>

<llo_original>
// kernel: tpu_custom_call.1
$region0: #{tpu_custom_call.1}
  #allocation0 [shape = 'u32[]', space=smem, size = 0x4, offset = 0x4, fixed_abs, tag = 'smem constant byte address 0x4 - core index']
  #allocation1 [shape = 'u32[144,128]{1,0:T(1,128)}', space=vmem, size = 0x12000, scoped, tag = 'internal scratch']
  %s0 = inlined_call_operand.vmem [shape: f32[48,33], index: 0, kind: input, shape index: {}]
  %s1 = inlined_call_operand.vmem [shape: f32[48,32], index: 1, kind: input, shape index: {}]
  %s2 = inlined_call_operand.hbm [shape: bf16[33,4224], index: 2, kind: input, shape index: {}]
  %s3 = inlined_call_operand.hbm [shape: f32[48,128], index: 3, kind: output, shape index: {}]
  %s4 = sld [smem:[#allocation0]]
  $region49: #{tpu_custom_call.1} parent=0
    _
  %s6 = ssub.s32 1, %s4
  %s7 = scalar_select 0, %s6, %s4
  $region1: #{tpu_custom_call.1} parent=0
    #allocation2 [shape = 'u8[337920]{0}', space=vmem, size = 0x52800, scoped, tag = 'input window, operand 2, single buffered']
    #allocation3 [shape = 's32[2]{0}', space=sflag, size = 0x8, scoped, tag = 'scoped memory for tpu_custom_call.1']
    #allocation4 [shape = 's32[2]{0}', space=sflag, size = 0x8, scoped, tag = 'scoped memory for tpu_custom_call.1']
    #allocation5 [shape = 'u8[16384]{0}', space=vmem, size = 0x4000, scoped, tag = 'output window, operand 0']
    %8 = vsyncpa [#allocation3], 0
    %9 = vsyncpa [#allocation4], 0
    %s10 = scalar_lea.sflag [#allocation4], 1
    %11 = vsyncpa %s10, 0
    loop: start=0, step=1, limit=5
    $region2: #{tpu_custom_call.1} parent=1 // loop_pre_header
      _
    $region3: #{tpu_custom_call.1} parent=1 // loop_header
      %s13 = sphi 0, %s17
      %p14 = scmp.ge.s32.totalorder %s13, 5
      %s23 = sphi 0, %s25
      %s26 = sphi 0, %s23
      %s27 = sphi 0, %s26
      %s43 = sphi 0, %s27
      %s49 = sphi 0, %s51
      %s52 = sphi 0, %s49
      %s53 = sphi 0, %s52
      %s69 = sphi 0, %s53
      %s73 = sphi 0, %s73
      %s75 = sphi 0, %s73
      %s76 = sphi 0, %s75
      %s90 = sphi 0, %s76
      %s96 = sphi 0, %s98
      %s99 = sphi 0, %s96
      %s100 = sphi 0, %s99
      %s116 = sphi 0, %s100
    $region4: #{tpu_custom_call.1} parent=1 // loop_header_branch
      %16 = sbr.rel (%p14) target = $region8
    $region5: #{tpu_custom_call.1} parent=1 // loop_body
      %s18 = ssub.s32 %s13, 1
      %s19 = ssub.s32 %s13, 2
      %s20 = sadd.s32 %s13, 1
      %s21 = ssub.s32 %s13, %s20
      %p22 = scmp.eq.s32.totalorder %s21, 0
      %s24 = sadd.s32 %s23, 1
      %s25 = scalar_select %p22, %s23, %s24
      %p28 = pneg %p22
      %p29 = scmp.eq.s32.totalorder %s13, 2
      %p30 = por %p28, %p29
      %p31 = scmp.ne.s32.totalorder %s23, %s26
      %p32 = scmp.eq.s32.totalorder %s13, 0
      %p33 = por %p31, %p32
      %p34 = scmp.ne.s32.totalorder %s23, %s26
      %p35 = scmp.eq.s32.totalorder %s18, 2
      %p36 = por %p34, %p35
      %p37 = scmp.ne.s32.totalorder %s26, %s27
      %p38 = scmp.eq.s32.totalorder %s18, 0
      %p39 = por %p37, %p38
      %p40 = scmp.ne.s32.totalorder %s26, %s27
      %p41 = scmp.eq.s32.totalorder %s19, 2
      %p42 = por %p40, %p41
      %p44 = scmp.ne.s32.totalorder %s27, %s43
      %p45 = scmp.eq.s32.totalorder %s19, 0
      %p46 = por %p44, %p45
      %s47 = ssub.s32 %s13, %s20
      %p48 = scmp.eq.s32.totalorder %s47, 0
      %s50 = sadd.s32 %s49, 1
      %s51 = scalar_select %p48, %s49, %s50
      %p54 = pneg %p48
      %p55 = scmp.eq.s32.totalorder %s13, 2
      %p56 = por %p54, %p55
      %p57 = scmp.ne.s32.totalorder %s49, %s52
      %p58 = scmp.eq.s32.totalorder %s13, 0
      %p59 = por %p57, %p58
      %p60 = scmp.ne.s32.totalorder %s49, %s52
      %p61 = scmp.eq.s32.totalorder %s18, 2
      %p62 = por %p60, %p61
      %p63 = scmp.ne.s32.totalorder %s52, %s53
      %p64 = scmp.eq.s32.totalorder %s18, 0
      %p65 = por %p63, %p64
      %p66 = scmp.ne.s32.totalorder %s52, %s53
      %p67 = scmp.eq.s32.totalorder %s19, 2
      %p68 = por %p66, %p67
      %p70 = scmp.ne.s32.totalorder %s53, %s69
      %p71 = scmp.eq.s32.totalorder %s19, 0
      %p72 = por %p70, %p71
      %s74 = sadd.s32 %s73, 1
      %p77 = scmp.eq.s32.totalorder %s13, 2
      %p78 = scmp.ne.s32.totalorder %s73, %s75
      %p79 = scmp.eq.s32.totalorder %s13, 0
      %p80 = por %p78, %p79
      %p81 = scmp.ne.s32.totalorder %s73, %s75
      %p82 = scmp.eq.s32.totalorder %s18, 2
      %p83 = por %p81, %p82
      %p84 = scmp.ne.s32.totalorder %s75, %s76
      %p85 = scmp.eq.s32.totalorder %s18, 0
      %p86 = por %p84, %p85
      %p87 = scmp.ne.s32.totalorder %s75, %s76
      %p88 = scmp.eq.s32.totalorder %s19, 2
      %p89 = por %p87, %p88
      %p91 = scmp.ne.s32.totalorder %s76, %s90
      %p92 = scmp.eq.s32.totalorder %s19, 0
      %p93 = por %p91, %p92
      %s94 = ssub.s32 %s13, %s20
      %p95 = scmp.eq.s32.totalorder %s94, 0
      %s97 = sadd.s32 %s96, 1
      %s98 = scalar_select %p95, %s96, %s97
      %p101 = pneg %p95
      %p102 = scmp.eq.s32.totalorder %s13, 2
      %p103 = por %p101, %p102
      %p104 = scmp.ne.s32.totalorder %s96, %s99
      %p105 = scmp.eq.s32.totalorder %s13, 0
      %p106 = por %p104, %p105
      %p107 = scmp.ne.s32.totalorder %s96, %s99
      %p108 = scmp.eq.s32.totalorder %s18, 2
      %p109 = por %p107, %p108
      %p110 = scmp.ne.s32.totalorder %s99, %s100
      %p111 = scmp.eq.s32.totalorder %s18, 0
      %p112 = por %p110, %p111
      %p113 = scmp.ne.s32.totalorder %s99, %s100
      %p114 = scmp.eq.s32.totalorder %s19, 2
      %p115 = por %p113, %p114
      %p117 = scmp.ne.s32.totalorder %s100, %s116
      %p118 = scmp.eq.s32.totalorder %s19, 0
      %p119 = por %p117, %p118
      %p120 = scmp.le.s32.totalorder 1, %s13
      %p121 = scmp.lt.s32.totalorder %s13, 4
      %p122 = pnand %p120, %p121
      %p123 = pneg %p122
      // Predicated region
      $region9: #{tpu_custom_call.1} parent=5 // pred_check
        _
      $region10: #{tpu_custom_call.1} parent=5 // pred_check_branch
        %125 = sbr.rel (%p122) target = $region12
      $region11: #{tpu_custom_call.1} parent=5 // pred_region
        %s126 = ssub.s32 %s13, 1
        // Predicated region
        $region13: #{tpu_custom_call.1} parent=11 // pred_check
          %p127 = pneg %p86
        $region14: #{tpu_custom_call.1} parent=11 // pred_check_branch
          %129 = sbr.rel (%p127) target = $region16
        $region15: #{tpu_custom_call.1} parent=11 // pred_region
          %s131 = ssub.s32 10560, 10560
          %132 = vsyncadd [#allocation3], %s131
          %s133 = sshll.u32 [#allocation2], 4
          %s134 = int_to_ptr.vmem [resolvable:$true] %s133
          %139 = dma.hbm_to_vmem [thread:$0]  %s2, 10560, %s134, [#allocation3], 2112, 2112, 132
        $region16: #{tpu_custom_call.1} parent=11 // pred_fallthru
          _
      $region12: #{tpu_custom_call.1} parent=5 // pred_fallthru
        _
      %p140 = scmp.lt.s32.totalorder %s13, 3
      // Predicated region
      $region17: #{tpu_custom_call.1} parent=5 // pred_check
        %p141 = pneg %p140
      $region18: #{tpu_custom_call.1} parent=5 // pred_check_branch
        %143 = sbr.rel (%p141) target = $region20
      $region19: #{tpu_custom_call.1} parent=5 // pred_region
        // Predicated region
        $region21: #{tpu_custom_call.1} parent=19 // pred_check
          %p144 = pneg %p33
        $region22: #{tpu_custom_call.1} parent=19 // pred_check_branch
          %146 = sbr.rel (%p144) target = $region24
        $region23: #{tpu_custom_call.1} parent=19 // pred_region
          %s147 = smul.u32 2, %s13
          %p148 = scmp.lt.s32.totalorder %s147, 5
          %s149 = scalar_select %p148, %s147, 5
          %s150 = smul.addr %s149, 8
          %s151 = scalar_lea.vmem %s0, %s150
          %s152 = smul.u32 2, %s13
        $region24: #{tpu_custom_call.1} parent=19 // pred_fallthru
          _
        // Predicated region
        $region25: #{tpu_custom_call.1} parent=19 // pred_check
          %p153 = pneg %p59
        $region26: #{tpu_custom_call.1} parent=19 // pred_check_branch
          %155 = sbr.rel (%p153) target = $region28
        $region27: #{tpu_custom_call.1} parent=19 // pred_region
          %s156 = smul.u32 2, %s13
          %p157 = scmp.lt.s32.totalorder %s156, 5
          %s158 = scalar_select %p157, %s156, 5
          %s159 = smul.addr %s158, 8
          %s160 = scalar_lea.vmem %s1, %s159
          %s161 = smul.u32 2, %s13
        $region28: #{tpu_custom_call.1} parent=19 // pred_fallthru
          _
      $region20: #{tpu_custom_call.1} parent=5 // pred_fallthru
        _
      %p162 = scmp.le.s32.totalorder 1, %s13
      %p163 = scmp.lt.s32.totalorder %s13, 4
      %p164 = pnand %p162, %p163
      %p165 = pneg %p164
      // Predicated region
      $region29: #{tpu_custom_call.1} parent=5 // pred_check
        _
      $region30: #{tpu_custom_call.1} parent=5 // pred_check_branch
        %167 = sbr.rel (%p164) target = $region32
      $region31: #{tpu_custom_call.1} parent=5 // pred_region
        %s168 = ssub.s32 %s13, 1
        // Predicated region
        $region33: #{tpu_custom_call.1} parent=31 // pred_check
          %p169 = pneg %p86
        $region34: #{tpu_custom_call.1} parent=31 // pred_check_branch
          %171 = sbr.rel (%p169) target = $region36
        $region35: #{tpu_custom_call.1} parent=31 // pred_region
          %172 = dma.done [#allocation3], 10560
        $region36: #{tpu_custom_call.1} parent=31 // pred_fallthru
          _
        %s173 = smul.u32 2, %s18
        %p174 = scmp.lt.s32.totalorder %s173, 5
        %s175 = scalar_select %p174, %s173, 5
        %s176 = smul.addr %s175, 8
        %s177 = scalar_lea.vmem %s0, %s176
        %p178 = pneg %p39
        %p179 = pneg %p36
        %s180 = smul.u32 2, %s18
        %p181 = scmp.lt.s32.totalorder %s180, 5
        %s182 = scalar_select %p181, %s180, 5
        %s183 = smul.addr %s182, 8
        %s184 = scalar_lea.vmem %s1, %s183
        %p185 = pneg %p65
        %p186 = pneg %p62
        %p187 = pneg %p86
        %p188 = pneg %p83
        %p189 = pneg %p112
        %p190 = pneg %p109
        %s191 = sand.u32 %s99, 1
        %s192 = scalar_lea.sflag [#allocation4], %s191
        %s193 = sand.u32 %s99, 1
        %s194 = smul.addr %s193, 16
        %s195 = scalar_lea.vmem [#allocation5], %s194
        %s196 = smul.u32 2, %s18
        %p197 = scmp.lt.s32.totalorder %s196, 5
        %s198 = scalar_select %p197, %s196, 5
        %s199 = smul.addr %s198, 8
        %s200 = scalar_lea.vmem %s0, %s199
        %s201 = smul.u32 2, %s18
        %s202 = smul.u32 2, %s18
        %p203 = scmp.lt.s32.totalorder %s202, 5
        %s204 = scalar_select %p203, %s202, 5
        %s205 = smul.addr %s204, 8
        %s206 = scalar_lea.vmem %s1, %s205
        %s207 = smul.u32 2, %s18
        %s208 = smul.u32 2, %s18
        %v210 = vld [vmem:[%s200] sm:$0xff]
        %v211 = vld [vmem:[%s200 + $0x8] sm:$0xff]
        %v212 = vpack.c.bf16 %v211, %v210
        %v213 = vld [vmem:[#allocation2] sm:$0xff]
        %v214 = vld [vmem:[#allocation2 + $0x8] sm:$0xff]
        %v215 = vld [vmem:[#allocation2 + $0x10] sm:$0xff]
        %v216 = vld [vmem:[#allocation2 + $0x18] sm:$0xff]
        %v217 = vld [vmem:[#allocation2 + $0x20] sm:$0xff]
        %v218 = vld [vmem:[#allocation2 + $0x28] sm:$0xff]
        %v219 = vld [vmem:[#allocation2 + $0x30] sm:$0xff]
        %v220 = vld [vmem:[#allocation2 + $0x38] sm:$0xff]
        %v221 = vld [vmem:[#allocation2 + $0x40] sm:$0xff]
        %v222 = vld [vmem:[#allocation2 + $0x48] sm:$0xff]
        %v223 = vld [vmem:[#allocation2 + $0x50] sm:$0xff]
        %v224 = vld [vmem:[#allocation2 + $0x58] sm:$0xff]
        %v225 = vld [vmem:[#allocation2 + $0x60] sm:$0xff]
        %v226 = vld [vmem:[#allocation2 + $0x68] sm:$0xff]
        %v227 = vld [vmem:[#allocation2 + $0x70] sm:$0xff]
        %v228 = vld [vmem:[#allocation2 + $0x78] sm:$0xff]
        %v229 = vld [vmem:[#allocation2 + $0x80] sm:$0xf]
        %v230 = vld [vmem:[#allocation2 + $0x84] sm:$0xff]
        %v231 = vld [vmem:[#allocation2 + $0x8c] sm:$0xff]
        %v232 = vld [vmem:[#allocation2 + $0x94] sm:$0xff]
        %v233 = vld [vmem:[#allocation2 + $0x9c] sm:$0xff]
        %v234 = vld [vmem:[#allocation2 + $0xa4] sm:$0xff]
        %v235 = vld [vmem:[#allocation2 + $0xac] sm:$0xff]
        %v236 = vld [vmem:[#allocation2 + $0xb4] sm:$0xff]
        %v237 = vld [vmem:[#allocation2 + $0xbc] sm:$0xff]
        %v238 = vld [vmem:[#allocation2 + $0xc4] sm:$0xff]
        %v239 = vld [vmem:[#allocation2 + $0xcc] sm:$0xff]
        %v240 = vld [vmem:[#allocation2 + $0xd4] sm:$0xff]
        %v241 = vld [vmem:[#allocation2 + $0xdc] sm:$0xff]
        %v242 = vld [vmem:[#allocation2 + $0xe4] sm:$0xff]
        %v243 = vld [vmem:[#allocation2 + $0xec] sm:$0xff]
        %v244 = vld [vmem:[#allocation2 + $0xf4] sm:$0xff]
        %v245 = vld [vmem:[#allocation2 + $0xfc] sm:$0xff]
        %v246 = vld [vmem:[#allocation2 + $0x104] sm:$0xf]
        %v247 = vld [vmem:[#allocation2 + $0x108] sm:$0xff]
        %v248 = vld [vmem:[#allocation2 + $0x110] sm:$0xff]
        %v249 = vld [vmem:[#allocation2 + $0x118] sm:$0xff]
        %v250 = vld [vmem:[#allocation2 + $0x120] sm:$0xff]
        %v251 = vld [vmem:[#allocation2 + $0x128] sm:$0xff]
        %v252 = vld [vmem:[#allocation2 + $0x130] sm:$0xff]
        %v253 = vld [vmem:[#allocation2 + $0x138] sm:$0xff]
        %v254 = vld [vmem:[#allocation2 + $0x140] sm:$0xff]
        %v255 = vld [vmem:[#allocation2 + $0x148] sm:$0xff]
        %v256 = vld [vmem:[#allocation2 + $0x150] sm:$0xff]
        %v257 = vld [vmem:[#allocation2 + $0x158] sm:$0xff]
        %v258 = vld [vmem:[#allocation2 + $0x160] sm:$0xff]
        %v259 = vld [vmem:[#allocation2 + $0x168] sm:$0xff]
        %v260 = vld [vmem:[#allocation2 + $0x170] sm:$0xff]
        %v261 = vld [vmem:[#allocation2 + $0x178] sm:$0xff]
        %v262 = vld [vmem:[#allocation2 + $0x180] sm:$0xff]
        %v263 = vld [vmem:[#allocation2 + $0x188] sm:$0xf]
        %v264 = vld [vmem:[#allocation2 + $0x18c] sm:$0xff]
        %v265 = vld [vmem:[#allocation2 + $0x194] sm:$0xff]
        %v266 = vld [vmem:[#allocation2 + $0x19c] sm:$0xff]
        %v267 = vld [vmem:[#allocation2 + $0x1a4] sm:$0xff]
        %v268 = vld [vmem:[#allocation2 + $0x1ac] sm:$0xff]
        %v269 = vld [vmem:[#allocation2 + $0x1b4] sm:$0xff]
        %v270 = vld [vmem:[#allocation2 + $0x1bc] sm:$0xff]
        %v271 = vld [vmem:[#allocation2 + $0x1c4] sm:$0xff]
        %v272 = vld [vmem:[#allocation2 + $0x1cc] sm:$0xff]
        %v273 = vld [vmem:[#allocation2 + $0x1d4] sm:$0xff]
        %v274 = vld [vmem:[#allocation2 + $0x1dc] sm:$0xff]
        %v275 = vld [vmem:[#allocation2 + $0x1e4] sm:$0xff]
        %v276 = vld [vmem:[#allocation2 + $0x1ec] sm:$0xff]
        %v277 = vld [vmem:[#allocation2 + $0x1f4] sm:$0xff]
        %v278 = vld [vmem:[#allocation2 + $0x1fc] sm:$0xff]
        %v279 = vld [vmem:[#allocation2 + $0x204] sm:$0xff]
        %v280 = vld [vmem:[#allocation2 + $0x20c] sm:$0xf]
        %v281 = vld [vmem:[#allocation2 + $0x210] sm:$0x11]
        %v282 = vld [vmem:[#allocation2 + $0x218] sm:$0x11]
        %v283 = vld [vmem:[#allocation2 + $0x220] sm:$0x11]
        %v284 = vld [vmem:[#allocation2 + $0x228] sm:$0x11]
        %v285 = vld [vmem:[#allocation2 + $0x230] sm:$0x11]
        %v286 = vld [vmem:[#allocation2 + $0x238] sm:$0x11]
        %v287 = vld [vmem:[#allocation2 + $0x240] sm:$0x11]
        %v288 = vld [vmem:[#allocation2 + $0x248] sm:$0x11]
        %v289 = vld [vmem:[#allocation2 + $0x250] sm:$0x11]
        %v290 = vld [vmem:[#allocation2 + $0x258] sm:$0x11]
        %v291 = vld [vmem:[#allocation2 + $0x260] sm:$0x11]
        %v292 = vld [vmem:[#allocation2 + $0x268] sm:$0x11]
        %v293 = vld [vmem:[#allocation2 + $0x270] sm:$0x11]
        %v294 = vld [vmem:[#allocation2 + $0x278] sm:$0x11]
        %v295 = vld [vmem:[#allocation2 + $0x280] sm:$0x11]
        %v296 = vld [vmem:[#allocation2 + $0x288] sm:$0x11]
        %v297 = vld [vmem:[#allocation2 + $0x290] sm:$0x1]
        %v383 = vunpack.c.l.b16 %v213
        %v384 = vunpack.c.h.b16 %v213
        %v385 = vunpack.c.l.b16 %v214
        %v386 = vunpack.c.h.b16 %v214
        %v387 = vunpack.c.l.b16 %v215
        %v388 = vunpack.c.h.b16 %v215
        %v389 = vunpack.c.l.b16 %v216
        %v390 = vunpack.c.h.b16 %v216
        %v391 = vunpack.c.l.b16 %v217
        %v392 = vunpack.c.h.b16 %v217
        %v393 = vunpack.c.l.b16 %v218
        %v394 = vunpack.c.h.b16 %v218
        %v395 = vunpack.c.l.b16 %v219
        %v396 = vunpack.c.h.b16 %v219
        %v397 = vunpack.c.l.b16 %v220
        %v398 = vunpack.c.h.b16 %v220
        %v399 = vunpack.c.l.b16 %v221
        %v400 = vunpack.c.h.b16 %v221
        %v401 = vunpack.c.l.b16 %v222
        %v402 = vunpack.c.h.b16 %v222
        %v403 = vunpack.c.l.b16 %v223
        %v404 = vunpack.c.h.b16 %v223
        %v405 = vunpack.c.l.b16 %v224
        %v406 = vunpack.c.h.b16 %v224
        %v407 = vunpack.c.l.b16 %v225
        %v408 = vunpack.c.h.b16 %v225
        %v409 = vunpack.c.l.b16 %v226
        %v410 = vunpack.c.h.b16 %v226
        %v411 = vunpack.c.l.b16 %v227
        %v412 = vunpack.c.h.b16 %v227
        %v413 = vunpack.c.l.b16 %v228
        %v414 = vunpack.c.h.b16 %v228
        %v415 = vunpack.c.l.b16 %v229
        %v416 = vunpack.c.l.b16 %v230
        %v417 = vunpack.c.h.b16 %v230
        %v418 = vunpack.c.l.b16 %v231
        %v419 = vunpack.c.h.b16 %v231
        %v420 = vunpack.c.l.b16 %v232
        %v421 = vunpack.c.h.b16 %v232
        %v422 = vunpack.c.l.b16 %v233
        %v423 = vunpack.c.h.b16 %v233
        %v424 = vunpack.c.l.b16 %v234
        %v425 = vunpack.c.h.b16 %v234
        %v426 = vunpack.c.l.b16 %v235
        %v427 = vunpack.c.h.b16 %v235
        %v428 = vunpack.c.l.b16 %v236
        %v429 = vunpack.c.h.b16 %v236
        %v430 = vunpack.c.l.b16 %v237
        %v431 = vunpack.c.h.b16 %v237
        %v432 = vunpack.c.l.b16 %v238
        %v433 = vunpack.c.h.b16 %v238
        %v434 = vunpack.c.l.b16 %v239
        %v435 = vunpack.c.h.b16 %v239
        %v436 = vunpack.c.l.b16 %v240
        %v437 = vunpack.c.h.b16 %v240
        %v438 = vunpack.c.l.b16 %v241
        %v439 = vunpack.c.h.b16 %v241
        %v440 = vunpack.c.l.b16 %v242
        %v441 = vunpack.c.h.b16 %v242
        %v442 = vunpack.c.l.b16 %v243
        %v443 = vunpack.c.h.b16 %v243
        %v444 = vunpack.c.l.b16 %v244
        %v445 = vunpack.c.h.b16 %v244
        %v446 = vunpack.c.l.b16 %v245
        %v447 = vunpack.c.h.b16 %v245
        %v448 = vunpack.c.l.b16 %v246
        %v449 = vunpack.c.l.b16 %v247
        %v450 = vunpack.c.h.b16 %v247
        %v451 = vunpack.c.l.b16 %v248
        %v452 = vunpack.c.h.b16 %v248
        %v453 = vunpack.c.l.b16 %v249
        %v454 = vunpack.c.h.b16 %v249
        %v455 = vunpack.c.l.b16 %v250
        %v456 = vunpack.c.h.b16 %v250
        %v457 = vunpack.c.l.b16 %v251
        %v458 = vunpack.c.h.b16 %v251
        %v459 = vunpack.c.l.b16 %v252
        %v460 = vunpack.c.h.b16 %v252
        %v461 = vunpack.c.l.b16 %v253
        %v462 = vunpack.c.h.b16 %v253
        %v463 = vunpack.c.l.b16 %v254
        %v464 = vunpack.c.h.b16 %v254
        %v465 = vunpack.c.l.b16 %v255
        %v466 = vunpack.c.h.b16 %v255
        %v467 = vunpack.c.l.b16 %v256
        %v468 = vunpack.c.h.b16 %v256
        %v469 = vunpack.c.l.b16 %v257
        %v470 = vunpack.c.h.b16 %v257
        %v471 = vunpack.c.l.b16 %v258
        %v472 = vunpack.c.h.b16 %v258
        %v473 = vunpack.c.l.b16 %v259
        %v474 = vunpack.c.h.b16 %v259
        %v475 = vunpack.c.l.b16 %v260
        %v476 = vunpack.c.h.b16 %v260
        %v477 = vunpack.c.l.b16 %v261
        %v478 = vunpack.c.h.b16 %v261
        %v479 = vunpack.c.l.b16 %v262
        %v480 = vunpack.c.h.b16 %v262
        %v481 = vunpack.c.l.b16 %v263
        %v482 = vunpack.c.l.b16 %v264
        %v483 = vunpack.c.h.b16 %v264
        %v484 = vunpack.c.l.b16 %v265
        %v485 = vunpack.c.h.b16 %v265
        %v486 = vunpack.c.l.b16 %v266
        %v487 = vunpack.c.h.b16 %v266
        %v488 = vunpack.c.l.b16 %v267
        %v489 = vunpack.c.h.b16 %v267
        %v490 = vunpack.c.l.b16 %v268
        %v491 = vunpack.c.h.b16 %v268
        %v492 = vunpack.c.l.b16 %v269
        %v493 = vunpack.c.h.b16 %v269
        %v494 = vunpack.c.l.b16 %v270
        %v495 = vunpack.c.h.b16 %v270
        %v496 = vunpack.c.l.b16 %v271
        %v497 = vunpack.c.h.b16 %v271
        %v498 = vunpack.c.l.b16 %v272
        %v499 = vunpack.c.h.b16 %v272
        %v500 = vunpack.c.l.b16 %v273
        %v501 = vunpack.c.h.b16 %v273
        %v502 = vunpack.c.l.b16 %v274
        %v503 = vunpack.c.h.b16 %v274
        %v504 = vunpack.c.l.b16 %v275
        %v505 = vunpack.c.h.b16 %v275
        %v506 = vunpack.c.l.b16 %v276
        %v507 = vunpack.c.h.b16 %v276
        %v508 = vunpack.c.l.b16 %v277
        %v509 = vunpack.c.h.b16 %v277
        %v510 = vunpack.c.l.b16 %v278
        %v511 = vunpack.c.h.b16 %v278
        %v512 = vunpack.c.l.b16 %v279
        %v513 = vunpack.c.h.b16 %v279
        %v514 = vunpack.c.l.b16 %v280
        %v515 = vunpack.c.l.b16 %v281
        %v516 = vunpack.c.h.b16 %v281
        %v517 = vunpack.c.l.b16 %v282
        %v518 = vunpack.c.h.b16 %v282
        %v519 = vunpack.c.l.b16 %v283
        %v520 = vunpack.c.h.b16 %v283
        %v521 = vunpack.c.l.b16 %v284
        %v522 = vunpack.c.h.b16 %v284
        %v523 = vunpack.c.l.b16 %v285
        %v524 = vunpack.c.h.b16 %v285
        %v525 = vunpack.c.l.b16 %v286
        %v526 = vunpack.c.h.b16 %v286
        %v527 = vunpack.c.l.b16 %v287
        %v528 = vunpack.c.h.b16 %v287
        %v529 = vunpack.c.l.b16 %v288
        %v530 = vunpack.c.h.b16 %v288
        %v531 = vunpack.c.l.b16 %v289
        %v532 = vunpack.c.h.b16 %v289
        %v533 = vunpack.c.l.b16 %v290
        %v534 = vunpack.c.h.b16 %v290
        %v535 = vunpack.c.l.b16 %v291
        %v536 = vunpack.c.h.b16 %v291
        %v537 = vunpack.c.l.b16 %v292
        %v538 = vunpack.c.h.b16 %v292
        %v539 = vunpack.c.l.b16 %v293
        %v540 = vunpack.c.h.b16 %v293
        %v541 = vunpack.c.l.b16 %v294
        %v542 = vunpack.c.h.b16 %v294
        %v543 = vunpack.c.l.b16 %v295
        %v544 = vunpack.c.h.b16 %v295
        %v545 = vunpack.c.l.b16 %v296
        %v546 = vunpack.c.h.b16 %v296
        %v547 = vunpack.c.l.b16 %v297
        %v548 = vpack.c.b16 %v416, %v383
        %v549 = vpack.c.b16 %v417, %v384
        %v550 = vpack.c.b16 %v418, %v385
        %v551 = vpack.c.b16 %v419, %v386
        %v552 = vpack.c.b16 %v420, %v387
        %v553 = vpack.c.b16 %v421, %v388
        %v554 = vpack.c.b16 %v422, %v389
        %v555 = vpack.c.b16 %v423, %v390
        %v556 = vpack.c.b16 %v424, %v391
        %v557 = vpack.c.b16 %v425, %v392
        %v558 = vpack.c.b16 %v426, %v393
        %v559 = vpack.c.b16 %v427, %v394
        %v560 = vpack.c.b16 %v428, %v395
        %v561 = vpack.c.b16 %v429, %v396
        %v562 = vpack.c.b16 %v430, %v397
        %v563 = vpack.c.b16 %v431, %v398
        %v564 = vpack.c.b16 %v432, %v399
        %v565 = vpack.c.b16 %v433, %v400
        %v566 = vpack.c.b16 %v434, %v401
        %v567 = vpack.c.b16 %v435, %v402
        %v568 = vpack.c.b16 %v436, %v403
        %v569 = vpack.c.b16 %v437, %v404
        %v570 = vpack.c.b16 %v438, %v405
        %v571 = vpack.c.b16 %v439, %v406
        %v572 = vpack.c.b16 %v440, %v407
        %v573 = vpack.c.b16 %v441, %v408
        %v574 = vpack.c.b16 %v442, %v409
        %v575 = vpack.c.b16 %v443, %v410
        %v576 = vpack.c.b16 %v444, %v411
        %v577 = vpack.c.b16 %v445, %v412
        %v578 = vpack.c.b16 %v446, %v413
        %v579 = vpack.c.b16 %v447, %v414
        %v580 = vpack.c.b16 %v448, %v415
        %v581 = vpack.c.b16 %v482, %v449
        %v582 = vpack.c.b16 %v483, %v450
        %v583 = vpack.c.b16 %v484, %v451
        %v584 = vpack.c.b16 %v485, %v452
        %v585 = vpack.c.b16 %v486, %v453
        %v586 = vpack.c.b16 %v487, %v454
        %v587 = vpack.c.b16 %v488, %v455
        %v588 = vpack.c.b16 %v489, %v456
        %v589 = vpack.c.b16 %v490, %v457
        %v590 = vpack.c.b16 %v491, %v458
        %v591 = vpack.c.b16 %v492, %v459
        %v592 = vpack.c.b16 %v493, %v460
        %v593 = vpack.c.b16 %v494, %v461
        %v594 = vpack.c.b16 %v495, %v462
        %v595 = vpack.c.b16 %v496, %v463
        %v596 = vpack.c.b16 %v497, %v464
        %v597 = vpack.c.b16 %v498, %v465
        %v598 = vpack.c.b16 %v499, %v466
        %v599 = vpack.c.b16 %v500, %v467
        %v600 = vpack.c.b16 %v501, %v468
        %v601 = vpack.c.b16 %v502, %v469
        %v602 = vpack.c.b16 %v503, %v470
        %v603 = vpack.c.b16 %v504, %v471
        %v604 = vpack.c.b16 %v505, %v472
        %v605 = vpack.c.b16 %v506, %v473
        %v606 = vpack.c.b16 %v507, %v474
        %v607 = vpack.c.b16 %v508, %v475
        %v608 = vpack.c.b16 %v509, %v476
        %v609 = vpack.c.b16 %v510, %v477
        %v610 = vpack.c.b16 %v511, %v478
        %v611 = vpack.c.b16 %v512, %v479
        %v612 = vpack.c.b16 %v513, %v480
        %v613 = vpack.c.b16 %v514, %v481
        %v614 = vpack.c.b16 %v515, %v515
        %v615 = vpack.c.b16 %v516, %v516
        %v616 = vpack.c.b16 %v517, %v517
        %v617 = vpack.c.b16 %v518, %v518
        %v618 = vpack.c.b16 %v519, %v519
        %v619 = vpack.c.b16 %v520, %v520
        %v620 = vpack.c.b16 %v521, %v521
        %v621 = vpack.c.b16 %v522, %v522
        %v622 = vpack.c.b16 %v523, %v523
        %v623 = vpack.c.b16 %v524, %v524
        %v624 = vpack.c.b16 %v525, %v525
        %v625 = vpack.c.b16 %v526, %v526
        %v626 = vpack.c.b16 %v527, %v527
        %v627 = vpack.c.b16 %v528, %v528
        %v628 = vpack.c.b16 %v529, %v529
        %v629 = vpack.c.b16 %v530, %v530
        %v630 = vpack.c.b16 %v531, %v531
        %v631 = vpack.c.b16 %v532, %v532
        %v632 = vpack.c.b16 %v533, %v533
        %v633 = vpack.c.b16 %v534, %v534
        %v634 = vpack.c.b16 %v535, %v535
        %v635 = vpack.c.b16 %v536, %v536
        %v636 = vpack.c.b16 %v537, %v537
        %v637 = vpack.c.b16 %v538, %v538
        %v638 = vpack.c.b16 %v539, %v539
        %v639 = vpack.c.b16 %v540, %v540
        %v640 = vpack.c.b16 %v541, %v541
        %v641 = vpack.c.b16 %v542, %v542
        %v642 = vpack.c.b16 %v543, %v543
        %v643 = vpack.c.b16 %v544, %v544
        %v644 = vpack.c.b16 %v545, %v545
        %v645 = vpack.c.b16 %v546, %v546
        %v646 = vpack.c.b16 %v547, %v547
        %vm713 = vcmask 269312
        %v715 = vsel %vm713, %v212, 0
        %vm717 = vcmask 1040384
        %v718 = vsel 0, 4294967295, 65535
        %v719 = vsel %vm717, %v718, 0
        %v721 = vand.u32 %v614, %v719
        %v724 = vand.u32 %v615, %v719
        %v727 = vand.u32 %v616, %v719
        %v730 = vand.u32 %v617, %v719
        %v733 = vand.u32 %v618, %v719
        %v736 = vand.u32 %v619, %v719
        %v739 = vand.u32 %v620, %v719
        %v742 = vand.u32 %v621, %v719
        %v745 = vand.u32 %v622, %v719
        %v748 = vand.u32 %v623, %v719
        %v751 = vand.u32 %v624, %v719
        %v754 = vand.u32 %v625, %v719
        %v757 = vand.u32 %v626, %v719
        %v760 = vand.u32 %v627, %v719
        %v763 = vand.u32 %v628, %v719
        %v766 = vand.u32 %v629, %v719
        %v769 = vand.u32 %v630, %v719
        %v772 = vand.u32 %v631, %v719
        %v775 = vand.u32 %v632, %v719
        %v778 = vand.u32 %v633, %v719
        %v781 = vand.u32 %v634, %v719
        %v784 = vand.u32 %v635, %v719
        %v787 = vand.u32 %v636, %v719
        %v790 = vand.u32 %v637, %v719
        %v793 = vand.u32 %v638, %v719
        %v796 = vand.u32 %v639, %v719
        %v799 = vand.u32 %v640, %v719
        %v802 = vand.u32 %v641, %v719
        %v805 = vand.u32 %v642, %v719
        %v808 = vand.u32 %v643, %v719
        %v811 = vand.u32 %v644, %v719
        %v814 = vand.u32 %v645, %v719
        %v817 = vand.u32 %v646, %v719
        %819 = vmatprep.subr.bf16.mxu0 0
        %820 = vmatpush1.bf16.msra.mxu0 0
        %821 = vmatprep.subr.bf16.mxu0 0
        %822 = vmatpush1.bf16.msra.mxu0 0
        %823 = vmatprep.subr.bf16.mxu0 0
        %824 = vmatpush1.bf16.msra.mxu0 0
        %825 = vmatprep.subr.bf16.mxu0 0
        %826 = vmatpush1.bf16.msra.mxu0 0
        %827 = vmatprep.subr.bf16.mxu0 0
        %828 = vmatpush1.bf16.msra.mxu0 0
        %829 = vmatprep.subr.bf16.mxu0 %v724
        %830 = vmatpush1.bf16.msra.mxu0 %v721
        %831 = vmatprep.subr.bf16.mxu0 %v582
        %832 = vmatpush1.bf16.msra.mxu0 %v581
        %833 = vmatprep.subr.bf16.mxu0 %v549
        %834 = vmatpush1.bf16.msra.mxu0 %v548
        %835 = vmatprep.subr.bf16.mxu0 0
        %836 = vmatpush2.bf16.msra.mxu0 0
        %837 = vmatprep.subr.bf16.mxu0 0
        %838 = vmatpush2.bf16.msra.mxu0 0
        %839 = vmatprep.subr.bf16.mxu0 0
        %840 = vmatpush2.bf16.msra.mxu0 0
        %841 = vmatprep.subr.bf16.mxu0 0
        %842 = vmatpush2.bf16.msra.mxu0 0
        %843 = vmatprep.subr.bf16.mxu0 0
        %844 = vmatpush2.bf16.msra.mxu0 0
        %845 = vmatprep.subr.bf16.mxu0 0
        %846 = vmatpush2.bf16.msra.mxu0 0
        %847 = vmatprep.subr.bf16.mxu0 0
        %848 = vmatpush2.bf16.msra.mxu0 0
        %849 = vmatprep.subr.bf16.mxu0 0
        %850 = vmatpush2.bf16.msra.mxu0 0
        %851 = vmatprep.mubr.bf16.mxu0 0
        %852 = vmatmul.mubr.bf16.gmra.mxu0 %v715
        %v853 = vpop.f32.mrf.mxu0
        %v854 = vadd.f32 0.0, %v853
        %v855 = vpop.f32.mrf.mxu0
        %v856 = vadd.f32 0.0, %v855
        %v857 = vpop.f32.mrf.mxu0
        %v858 = vadd.f32 0.0, %v857
        %v859 = vpop.f32.mrf.mxu0
        %v860 = vadd.f32 0.0, %v859
        %861 = vdwg.mxu0
        %862 = vmatprep.subr.bf16.mxu0 0
        %863 = vmatpush1.bf16.msra.mxu0 0
        %864 = vmatprep.subr.bf16.mxu0 0
        %865 = vmatpush1.bf16.msra.mxu0 0
        %866 = vmatprep.subr.bf16.mxu0 0
        %867 = vmatpush1.bf16.msra.mxu0 0
        %868 = vmatprep.subr.bf16.mxu0 0
        %869 = vmatpush1.bf16.msra.mxu0 0
        %870 = vmatprep.subr.bf16.mxu0 0
        %871 = vmatpush1.bf16.msra.mxu0 0
        %872 = vmatprep.subr.bf16.mxu0 %v730
        %873 = vmatpush1.bf16.msra.mxu0 %v727
        %874 = vmatprep.subr.bf16.mxu0 %v584
        %875 = vmatpush1.bf16.msra.mxu0 %v583
        %876 = vmatprep.subr.bf16.mxu0 %v551
        %877 = vmatpush1.bf16.msra.mxu0 %v550
        %878 = vmatprep.subr.bf16.mxu0 0
        %879 = vmatpush2.bf16.msra.mxu0 0
        %880 = vmatprep.subr.bf16.mxu0 0
        %881 = vmatpush2.bf16.msra.mxu0 0
        %882 = vmatprep.subr.bf16.mxu0 0
        %883 = vmatpush2.bf16.msra.mxu0 0
        %884 = vmatprep.subr.bf16.mxu0 0
        %885 = vmatpush2.bf16.msra.mxu0 0
        %886 = vmatprep.subr.bf16.mxu0 0
        %887 = vmatpush2.bf16.msra.mxu0 0
        %888 = vmatprep.subr.bf16.mxu0 0
        %889 = vmatpush2.bf16.msra.mxu0 0
        %890 = vmatprep.subr.bf16.mxu0 0
        %891 = vmatpush2.bf16.msra.mxu0 0
        %892 = vmatprep.subr.bf16.mxu0 0
        %893 = vmatpush2.bf16.msra.mxu0 0
        %894 = vmatprep.mubr.bf16.mxu0 0
        %895 = vmatmul.mubr.bf16.gmra.mxu0 %v715
        %v896 = vpop.f32.mrf.mxu0
        %v897 = vadd.f32 0.0, %v896
        %v898 = vpop.f32.mrf.mxu0
        %v899 = vadd.f32 0.0, %v898
        %v900 = vpop.f32.mrf.mxu0
        %v901 = vadd.f32 0.0, %v900
        %v902 = vpop.f32.mrf.mxu0
        %v903 = vadd.f32 0.0, %v902
        %904 = vdwg.mxu0
        %905 = vmatprep.subr.bf16.mxu0 0
        %906 = vmatpush1.bf16.msra.mxu0 0
        %907 = vmatprep.subr.bf16.mxu0 0
        %908 = vmatpush1.bf16.msra.mxu0 0
        %909 = vmatprep.subr.bf16.mxu0 0
        %910 = vmatpush1.bf16.msra.mxu0 0
        %911 = vmatprep.subr.bf16.mxu0 0
        %912 = vmatpush1.bf16.msra.mxu0 0
        %913 = vmatprep.subr.bf16.mxu0 0
        %914 = vmatpush1.bf16.msra.mxu0 0
        %915 = vmatprep.subr.bf16.mxu0 %v736
        %916 = vmatpush1.bf16.msra.mxu0 %v733
        %917 = vmatprep.subr.bf16.mxu0 %v586
        %918 = vmatpush1.bf16.msra.mxu0 %v585
        %919 = vmatprep.subr.bf16.mxu0 %v553
        %920 = vmatpush1.bf16.msra.mxu0 %v552
        %921 = vmatprep.subr.bf16.mxu0 0
        %922 = vmatpush2.bf16.msra.mxu0 0
        %923 = vmatprep.subr.bf16.mxu0 0
        %924 = vmatpush2.bf16.msra.mxu0 0
        %925 = vmatprep.subr.bf16.mxu0 0
        %926 = vmatpush2.bf16.msra.mxu0 0
        %927 = vmatprep.subr.bf16.mxu0 0
        %928 = vmatpush2.bf16.msra.mxu0 0
        %929 = vmatprep.subr.bf16.mxu0 0
        %930 = vmatpush2.bf16.msra.mxu0 0
        %931 = vmatprep.subr.bf16.mxu0 0
        %932 = vmatpush2.bf16.msra.mxu0 0
        %933 = vmatprep.subr.bf16.mxu0 0
        %934 = vmatpush2.bf16.msra.mxu0 0
        %935 = vmatprep.subr.bf16.mxu0 0
        %936 = vmatpush2.bf16.msra.mxu0 0
        %937 = vmatprep.mubr.bf16.mxu0 0
        %938 = vmatmul.mubr.bf16.gmra.mxu0 %v715
        %v939 = vpop.f32.mrf.mxu0
        %v940 = vadd.f32 0.0, %v939
        %v941 = vpop.f32.mrf.mxu0
        %v942 = vadd.f32 0.0, %v941
        %v943 = vpop.f32.mrf.mxu0
        %v944 = vadd.f32 0.0, %v943
        %v945 = vpop.f32.mrf.mxu0
        %v946 = vadd.f32 0.0, %v945
        %947 = vdwg.mxu0
        %948 = vmatprep.subr.bf16.mxu0 0
        %949 = vmatpush1.bf16.msra.mxu0 0
        %950 = vmatprep.subr.bf16.mxu0 0
        %951 = vmatpush1.bf16.msra.mxu0 0
        %952 = vmatprep.subr.bf16.mxu0 0
        %953 = vmatpush1.bf16.msra.mxu0 0
        %954 = vmatprep.subr.bf16.mxu0 0
        %955 = vmatpush1.bf16.msra.mxu0 0
        %956 = vmatprep.subr.bf16.mxu0 0
        %957 = vmatpush1.bf16.msra.mxu0 0
        %958 = vmatprep.subr.bf16.mxu0 %v742
        %959 = vmatpush1.bf16.msra.mxu0 %v739
        %960 = vmatprep.subr.bf16.mxu0 %v588
        %961 = vmatpush1.bf16.msra.mxu0 %v587
        %962 = vmatprep.subr.bf16.mxu0 %v555
        %963 = vmatpush1.bf16.msra.mxu0 %v554
        %964 = vmatprep.subr.bf16.mxu0 0
        %965 = vmatpush2.bf16.msra.mxu0 0
        %966 = vmatprep.subr.bf16.mxu0 0
        %967 = vmatpush2.bf16.msra.mxu0 0
        %968 = vmatprep.subr.bf16.mxu0 0
        %969 = vmatpush2.bf16.msra.mxu0 0
        %970 = vmatprep.subr.bf16.mxu0 0
        %971 = vmatpush2.bf16.msra.mxu0 0
        %972 = vmatprep.subr.bf16.mxu0 0
        %973 = vmatpush2.bf16.msra.mxu0 0
        %974 = vmatprep.subr.bf16.mxu0 0
        %975 = vmatpush2.bf16.msra.mxu0 0
        %976 = vmatprep.subr.bf16.mxu0 0
        %977 = vmatpush2.bf16.msra.mxu0 0
        %978 = vmatprep.subr.bf16.mxu0 0
        %979 = vmatpush2.bf16.msra.mxu0 0
        %980 = vmatprep.mubr.bf16.mxu0 0
        %981 = vmatmul.mubr.bf16.gmra.mxu0 %v715
        %v982 = vpop.f32.mrf.mxu0
        %v983 = vadd.f32 0.0, %v982
        %v984 = vpop.f32.mrf.mxu0
        %v985 = vadd.f32 0.0, %v984
        %v986 = vpop.f32.mrf.mxu0
        %v987 = vadd.f32 0.0, %v986
        %v988 = vpop.f32.mrf.mxu0
        %v989 = vadd.f32 0.0, %v988
        %990 = vdwg.mxu0
        %991 = vmatprep.subr.bf16.mxu0 0
        %992 = vmatpush1.bf16.msra.mxu0 0
        %993 = vmatprep.subr.bf16.mxu0 0
        %994 = vmatpush1.bf16.msra.mxu0 0
        %995 = vmatprep.subr.bf16.mxu0 0
        %996 = vmatpush1.bf16.msra.mxu0 0
        %997 = vmatprep.subr.bf16.mxu0 0
        %998 = vmatpush1.bf16.msra.mxu0 0
        %999 = vmatprep.subr.bf16.mxu0 0
        %1000 = vmatpush1.bf16.msra.mxu0 0
        %1001 = vmatprep.subr.bf16.mxu0 %v748
        %1002 = vmatpush1.bf16.msra.mxu0 %v745
        %1003 = vmatprep.subr.bf16.mxu0 %v590
        %1004 = vmatpush1.bf16.msra.mxu0 %v589
        %1005 = vmatprep.subr.bf16.mxu0 %v557
        %1006 = vmatpush1.bf16.msra.mxu0 %v556
        %1007 = vmatprep.subr.bf16.mxu0 0
        %1008 = vmatpush2.bf16.msra.mxu0 0
        %1009 = vmatprep.subr.bf16.mxu0 0
        %1010 = vmatpush2.bf16.msra.mxu0 0
        %1011 = vmatprep.subr.bf16.mxu0 0
        %1012 = vmatpush2.bf16.msra.mxu0 0
        %1013 = vmatprep.subr.bf16.mxu0 0
        %1014 = vmatpush2.bf16.msra.mxu0 0
        %1015 = vmatprep.subr.bf16.mxu0 0
        %1016 = vmatpush2.bf16.msra.mxu0 0
        %1017 = vmatprep.subr.bf16.mxu0 0
        %1018 = vmatpush2.bf16.msra.mxu0 0
        %1019 = vmatprep.subr.bf16.mxu0 0
        %1020 = vmatpush2.bf16.msra.mxu0 0
        %1021 = vmatprep.subr.bf16.mxu0 0
        %1022 = vmatpush2.bf16.msra.mxu0 0
        %1023 = vmatprep.mubr.bf16.mxu0 0
        %1024 = vmatmul.mubr.bf16.gmra.mxu0 %v715
        %v1025 = vpop.f32.mrf.mxu0
        %v1026 = vadd.f32 0.0, %v1025
        %v1027 = vpop.f32.mrf.mxu0
        %v1028 = vadd.f32 0.0, %v1027
        %v1029 = vpop.f32.mrf.mxu0
        %v1030 = vadd.f32 0.0, %v1029
        %v1031 = vpop.f32.mrf.mxu0
        %v1032 = vadd.f32 0.0, %v1031
        %1033 = vdwg.mxu0
        %1034 = vmatprep.subr.bf16.mxu0 0
        %1035 = vmatpush1.bf16.msra.mxu0 0
        %1036 = vmatprep.subr.bf16.mxu0 0
        %1037 = vmatpush1.bf16.msra.mxu0 0
        %1038 = vmatprep.subr.bf16.mxu0 0
        %1039 = vmatpush1.bf16.msra.mxu0 0
        %1040 = vmatprep.subr.bf16.mxu0 0
        %1041 = vmatpush1.bf16.msra.mxu0 0
        %1042 = vmatprep.subr.bf16.mxu0 0
        %1043 = vmatpush1.bf16.msra.mxu0 0
        %1044 = vmatprep.subr.bf16.mxu0 %v754
        %1045 = vmatpush1.bf16.msra.mxu0 %v751
        %1046 = vmatprep.subr.bf16.mxu0 %v592
        %1047 = vmatpush1.bf16.msra.mxu0 %v591
        %1048 = vmatprep.subr.bf16.mxu0 %v559
        %1049 = vmatpush1.bf16.msra.mxu0 %v558
        %1050 = vmatprep.subr.bf16.mxu0 0
        %1051 = vmatpush2.bf16.msra.mxu0 0
        %1052 = vmatprep.subr.bf16.mxu0 0
        %1053 = vmatpush2.bf16.msra.mxu0 0
        %1054 = vmatprep.subr.bf16.mxu0 0
        %1055 = vmatpush2.bf16.msra.mxu0 0
        %1056 = vmatprep.subr.bf16.mxu0 0
        %1057 = vmatpush2.bf16.msra.mxu0 0
        %1058 = vmatprep.subr.bf16.mxu0 0
        %1059 = vmatpush2.bf16.msra.mxu0 0
        %1060 = vmatprep.subr.bf16.mxu0 0
        %1061 = vmatpush2.bf16.msra.mxu0 0
        %1062 = vmatprep.subr.bf16.mxu0 0
        %1063 = vmatpush2.bf16.msra.mxu0 0
        %1064 = vmatprep.subr.bf16.mxu0 0
        %1065 = vmatpush2.bf16.msra.mxu0 0
        %1066 = vmatprep.mubr.bf16.mxu0 0
        %1067 = vmatmul.mubr.bf16.gmra.mxu0 %v715
        %v1068 = vpop.f32.mrf.mxu0
        %v1069 = vadd.f32 0.0, %v1068
        %v1070 = vpop.f32.mrf.mxu0
        %v1071 = vadd.f32 0.0, %v1070
        %v1072 = vpop.f32.mrf.mxu0
        %v1073 = vadd.f32 0.0, %v1072
        %v1074 = vpop.f32.mrf.mxu0
        %v1075 = vadd.f32 0.0, %v1074
        %1076 = vdwg.mxu0
        %1077 = vmatprep.subr.bf16.mxu0 0
        %1078 = vmatpush1.bf16.msra.mxu0 0
        %1079 = vmatprep.subr.bf16.mxu0 0
        %1080 = vmatpush1.bf16.msra.mxu0 0
        %1081 = vmatprep.subr.bf16.mxu0 0
        %1082 = vmatpush1.bf16.msra.mxu0 0
        %1083 = vmatprep.subr.bf16.mxu0 0
        %1084 = vmatpush1.bf16.msra.mxu0 0
        %1085 = vmatprep.subr.bf16.mxu0 0
        %1086 = vmatpush1.bf16.msra.mxu0 0
        %1087 = vmatprep.subr.bf16.mxu0 %v760
        %1088 = vmatpush1.bf16.msra.mxu0 %v757
        %1089 = vmatprep.subr.bf16.mxu0 %v594
        %1090 = vmatpush1.bf16.msra.mxu0 %v593
        %1091 = vmatprep.subr.bf16.mxu0 %v561
        %1092 = vmatpush1.bf16.msra.mxu0 %v560
        %1093 = vmatprep.subr.bf16.mxu0 0
        %1094 = vmatpush2.bf16.msra.mxu0 0
        %1095 = vmatprep.subr.bf16.mxu0 0
        %1096 = vmatpush2.bf16.msra.mxu0 0
        %1097 = vmatprep.subr.bf16.mxu0 0
        %1098 = vmatpush2.bf16.msra.mxu0 0
        %1099 = vmatprep.subr.bf16.mxu0 0
        %1100 = vmatpush2.bf16.msra.mxu0 0
        %1101 = vmatprep.subr.bf16.mxu0 0
        %1102 = vmatpush2.bf16.msra.mxu0 0
        %1103 = vmatprep.subr.bf16.mxu0 0
        %1104 = vmatpush2.bf16.msra.mxu0 0
        %1105 = vmatprep.subr.bf16.mxu0 0
        %1106 = vmatpush2.bf16.msra.mxu0 0
        %1107 = vmatprep.subr.bf16.mxu0 0
        %1108 = vmatpush2.bf16.msra.mxu0 0
        %1109 = vmatprep.mubr.bf16.mxu0 0
        %1110 = vmatmul.mubr.bf16.gmra.mxu0 %v715
        %v1111 = vpop.f32.mrf.mxu0
        %v1112 = vadd.f32 0.0, %v1111
        %v1113 = vpop.f32.mrf.mxu0
        %v1114 = vadd.f32 0.0, %v1113
        %v1115 = vpop.f32.mrf.mxu0
        %v1116 = vadd.f32 0.0, %v1115
        %v1117 = vpop.f32.mrf.mxu0
        %v1118 = vadd.f32 0.0, %v1117
        %1119 = vdwg.mxu0
        %1120 = vmatprep.subr.bf16.mxu0 0
        %1121 = vmatpush1.bf16.msra.mxu0 0
        %1122 = vmatprep.subr.bf16.mxu0 0
        %1123 = vmatpush1.bf16.msra.mxu0 0
        %1124 = vmatprep.subr.bf16.mxu0 0
        %1125 = vmatpush1.bf16.msra.mxu0 0
        %1126 = vmatprep.subr.bf16.mxu0 0
        %1127 = vmatpush1.bf16.msra.mxu0 0
        %1128 = vmatprep.subr.bf16.mxu0 0
        %1129 = vmatpush1.bf16.msra.mxu0 0
        %1130 = vmatprep.subr.bf16.mxu0 %v766
        %1131 = vmatpush1.bf16.msra.mxu0 %v763
        %1132 = vmatprep.subr.bf16.mxu0 %v596
        %1133 = vmatpush1.bf16.msra.mxu0 %v595
        %1134 = vmatprep.subr.bf16.mxu0 %v563
        %1135 = vmatpush1.bf16.msra.mxu0 %v562
        %1136 = vmatprep.subr.bf16.mxu0 0
        %1137 = vmatpush2.bf16.msra.mxu0 0
        %1138 = vmatprep.subr.bf16.mxu0 0
        %1139 = vmatpush2.bf16.msra.mxu0 0
        %1140 = vmatprep.subr.bf16.mxu0 0
        %1141 = vmatpush2.bf16.msra.mxu0 0
        %1142 = vmatprep.subr.bf16.mxu0 0
        %1143 = vmatpush2.bf16.msra.mxu0 0
        %1144 = vmatprep.subr.bf16.mxu0 0
        %1145 = vmatpush2.bf16.msra.mxu0 0
        %1146 = vmatprep.subr.bf16.mxu0 0
        %1147 = vmatpush2.bf16.msra.mxu0 0
        %1148 = vmatprep.subr.bf16.mxu0 0
        %1149 = vmatpush2.bf16.msra.mxu0 0
        %1150 = vmatprep.subr.bf16.mxu0 0
        %1151 = vmatpush2.bf16.msra.mxu0 0
        %1152 = vmatprep.mubr.bf16.mxu0 0
        %1153 = vmatmul.mubr.bf16.gmra.mxu0 %v715
        %v1154 = vpop.f32.mrf.mxu0
        %v1155 = vadd.f32 0.0, %v1154
        %v1156 = vpop.f32.mrf.mxu0
        %v1157 = vadd.f32 0.0, %v1156
        %v1158 = vpop.f32.mrf.mxu0
        %v1159 = vadd.f32 0.0, %v1158
        %v1160 = vpop.f32.mrf.mxu0
        %v1161 = vadd.f32 0.0, %v1160
        %1162 = vdwg.mxu0
        %1163 = vmatprep.subr.bf16.mxu0 0
        %1164 = vmatpush1.bf16.msra.mxu0 0
        %1165 = vmatprep.subr.bf16.mxu0 0
        %1166 = vmatpush1.bf16.msra.mxu0 0
        %1167 = vmatprep.subr.bf16.mxu0 0
        %1168 = vmatpush1.bf16.msra.mxu0 0
        %1169 = vmatprep.subr.bf16.mxu0 0
        %1170 = vmatpush1.bf16.msra.mxu0 0
        %1171 = vmatprep.subr.bf16.mxu0 0
        %1172 = vmatpush1.bf16.msra.mxu0 0
        %1173 = vmatprep.subr.bf16.mxu0 %v772
        %1174 = vmatpush1.bf16.msra.mxu0 %v769
        %1175 = vmatprep.subr.bf16.mxu0 %v598
        %1176 = vmatpush1.bf16.msra.mxu0 %v597
        %1177 = vmatprep.subr.bf16.mxu0 %v565
        %1178 = vmatpush1.bf16.msra.mxu0 %v564
        %1179 = vmatprep.subr.bf16.mxu0 0
        %1180 = vmatpush2.bf16.msra.mxu0 0
        %1181 = vmatprep.subr.bf16.mxu0 0
        %1182 = vmatpush2.bf16.msra.mxu0 0
        %1183 = vmatprep.subr.bf16.mxu0 0
        %1184 = vmatpush2.bf16.msra.mxu0 0
        %1185 = vmatprep.subr.bf16.mxu0 0
        %1186 = vmatpush2.bf16.msra.mxu0 0
        %1187 = vmatprep.subr.bf16.mxu0 0
        %1188 = vmatpush2.bf16.msra.mxu0 0
        %1189 = vmatprep.subr.bf16.mxu0 0
        %1190 = vmatpush2.bf16.msra.mxu0 0
        %1191 = vmatprep.subr.bf16.mxu0 0
        %1192 = vmatpush2.bf16.msra.mxu0 0
        %1193 = vmatprep.subr.bf16.mxu0 0
        %1194 = vmatpush2.bf16.msra.mxu0 0
        %1195 = vmatprep.mubr.bf16.mxu0 0
        %1196 = vmatmul.mubr.bf16.gmra.mxu0 %v715
        %v1197 = vpop.f32.mrf.mxu0
        %v1198 = vadd.f32 0.0, %v1197
        %v1199 = vpop.f32.mrf.mxu0
        %v1200 = vadd.f32 0.0, %v1199
        %v1201 = vpop.f32.mrf.mxu0
        %v1202 = vadd.f32 0.0, %v1201
        %v1203 = vpop.f32.mrf.mxu0
        %v1204 = vadd.f32 0.0, %v1203
        %1205 = vdwg.mxu0
        %1206 = vmatprep.subr.bf16.mxu0 0
        %1207 = vmatpush1.bf16.msra.mxu0 0
        %1208 = vmatprep.subr.bf16.mxu0 0
        %1209 = vmatpush1.bf16.msra.mxu0 0
        %1210 = vmatprep.subr.bf16.mxu0 0
        %1211 = vmatpush1.bf16.msra.mxu0 0
        %1212 = vmatprep.subr.bf16.mxu0 0
        %1213 = vmatpush1.bf16.msra.mxu0 0
        %1214 = vmatprep.subr.bf16.mxu0 0
        %1215 = vmatpush1.bf16.msra.mxu0 0
        %1216 = vmatprep.subr.bf16.mxu0 %v778
        %1217 = vmatpush1.bf16.msra.mxu0 %v775
        %1218 = vmatprep.subr.bf16.mxu0 %v600
        %1219 = vmatpush1.bf16.msra.mxu0 %v599
        %1220 = vmatprep.subr.bf16.mxu0 %v567
        %1221 = vmatpush1.bf16.msra.mxu0 %v566
        %1222 = vmatprep.subr.bf16.mxu0 0
        %1223 = vmatpush2.bf16.msra.mxu0 0
        %1224 = vmatprep.subr.bf16.mxu0 0
        %1225 = vmatpush2.bf16.msra.mxu0 0
        %1226 = vmatprep.subr.bf16.mxu0 0
        %1227 = vmatpush2.bf16.msra.mxu0 0
        %1228 = vmatprep.subr.bf16.mxu0 0
        %1229 = vmatpush2.bf16.msra.mxu0 0
        %1230 = vmatprep.subr.bf16.mxu0 0
        %1231 = vmatpush2.bf16.msra.mxu0 0
        %1232 = vmatprep.subr.bf16.mxu0 0
        %1233 = vmatpush2.bf16.msra.mxu0 0
        %1234 = vmatprep.subr.bf16.mxu0 0
        %1235 = vmatpush2.bf16.msra.mxu0 0
        %1236 = vmatprep.subr.bf16.mxu0 0
        %1237 = vmatpush2.bf16.msra.mxu0 0
        %1238 = vmatprep.mubr.bf16.mxu0 0
        %1239 = vmatmul.mubr.bf16.gmra.mxu0 %v715
        %v1240 = vpop.f32.mrf.mxu0
        %v1241 = vadd.f32 0.0, %v1240
        %v1242 = vpop.f32.mrf.mxu0
        %v1243 = vadd.f32 0.0, %v1242
        %v1244 = vpop.f32.mrf.mxu0
        %v1245 = vadd.f32 0.0, %v1244
        %v1246 = vpop.f32.mrf.mxu0
        %v1247 = vadd.f32 0.0, %v1246
        %1248 = vdwg.mxu0
        %1249 = vmatprep.subr.bf16.mxu0 0
        %1250 = vmatpush1.bf16.msra.mxu0 0
        %1251 = vmatprep.subr.bf16.mxu0 0
        %1252 = vmatpush1.bf16.msra.mxu0 0
        %1253 = vmatprep.subr.bf16.mxu0 0
        %1254 = vmatpush1.bf16.msra.mxu0 0
        %1255 = vmatprep.subr.bf16.mxu0 0
        %1256 = vmatpush1.bf16.msra.mxu0 0
        %1257 = vmatprep.subr.bf16.mxu0 0
        %1258 = vmatpush1.bf16.msra.mxu0 0
        %1259 = vmatprep.subr.bf16.mxu0 %v784
        %1260 = vmatpush1.bf16.msra.mxu0 %v781
        %1261 = vmatprep.subr.bf16.mxu0 %v602
        %1262 = vmatpush1.bf16.msra.mxu0 %v601
        %1263 = vmatprep.subr.bf16.mxu0 %v569
        %1264 = vmatpush1.bf16.msra.mxu0 %v568
        %1265 = vmatprep.subr.bf16.mxu0 0
        %1266 = vmatpush2.bf16.msra.mxu0 0
        %1267 = vmatprep.subr.bf16.mxu0 0
        %1268 = vmatpush2.bf16.msra.mxu0 0
        %1269 = vmatprep.subr.bf16.mxu0 0
        %1270 = vmatpush2.bf16.msra.mxu0 0
        %1271 = vmatprep.subr.bf16.mxu0 0
        %1272 = vmatpush2.bf16.msra.mxu0 0
        %1273 = vmatprep.subr.bf16.mxu0 0
        %1274 = vmatpush2.bf16.msra.mxu0 0
        %1275 = vmatprep.subr.bf16.mxu0 0
        %1276 = vmatpush2.bf16.msra.mxu0 0
        %1277 = vmatprep.subr.bf16.mxu0 0
        %1278 = vmatpush2.bf16.msra.mxu0 0
        %1279 = vmatprep.subr.bf16.mxu0 0
        %1280 = vmatpush2.bf16.msra.mxu0 0
        %1281 = vmatprep.mubr.bf16.mxu0 0
        %1282 = vmatmul.mubr.bf16.gmra.mxu0 %v715
        %v1283 = vpop.f32.mrf.mxu0
        %v1284 = vadd.f32 0.0, %v1283
        %v1285 = vpop.f32.mrf.mxu0
        %v1286 = vadd.f32 0.0, %v1285
        %v1287 = vpop.f32.mrf.mxu0
        %v1288 = vadd.f32 0.0, %v1287
        %v1289 = vpop.f32.mrf.mxu0
        %v1290 = vadd.f32 0.0, %v1289
        %1291 = vdwg.mxu0
        %1292 = vmatprep.subr.bf16.mxu0 0
        %1293 = vmatpush1.bf16.msra.mxu0 0
        %1294 = vmatprep.subr.bf16.mxu0 0
        %1295 = vmatpush1.bf16.msra.mxu0 0
        %1296 = vmatprep.subr.bf16.mxu0 0
        %1297 = vmatpush1.bf16.msra.mxu0 0
        %1298 = vmatprep.subr.bf16.mxu0 0
        %1299 = vmatpush1.bf16.msra.mxu0 0
        %1300 = vmatprep.subr.bf16.mxu0 0
        %1301 = vmatpush1.bf16.msra.mxu0 0
        %1302 = vmatprep.subr.bf16.mxu0 %v790
        %1303 = vmatpush1.bf16.msra.mxu0 %v787
        %1304 = vmatprep.subr.bf16.mxu0 %v604
        %1305 = vmatpush1.bf16.msra.mxu0 %v603
        %1306 = vmatprep.subr.bf16.mxu0 %v571
        %1307 = vmatpush1.bf16.msra.mxu0 %v570
        %1308 = vmatprep.subr.bf16.mxu0 0
        %1309 = vmatpush2.bf16.msra.mxu0 0
        %1310 = vmatprep.subr.bf16.mxu0 0
        %1311 = vmatpush2.bf16.msra.mxu0 0
        %1312 = vmatprep.subr.bf16.mxu0 0
        %1313 = vmatpush2.bf16.msra.mxu0 0
        %1314 = vmatprep.subr.bf16.mxu0 0
        %1315 = vmatpush2.bf16.msra.mxu0 0
        %1316 = vmatprep.subr.bf16.mxu0 0
        %1317 = vmatpush2.bf16.msra.mxu0 0
        %1318 = vmatprep.subr.bf16.mxu0 0
        %1319 = vmatpush2.bf16.msra.mxu0 0
        %1320 = vmatprep.subr.bf16.mxu0 0
        %1321 = vmatpush2.bf16.msra.mxu0 0
        %1322 = vmatprep.subr.bf16.mxu0 0
        %1323 = vmatpush2.bf16.msra.mxu0 0
        %1324 = vmatprep.mubr.bf16.mxu0 0
        %1325 = vmatmul.mubr.bf16.gmra.mxu0 %v715
        %v1326 = vpop.f32.mrf.mxu0
        %v1327 = vadd.f32 0.0, %v1326
        %v1328 = vpop.f32.mrf.mxu0
        %v1329 = vadd.f32 0.0, %v1328
        %v1330 = vpop.f32.mrf.mxu0
        %v1331 = vadd.f32 0.0, %v1330
        %v1332 = vpop.f32.mrf.mxu0
        %v1333 = vadd.f32 0.0, %v1332
        %1334 = vdwg.mxu0
        %1335 = vmatprep.subr.bf16.mxu0 0
        %1336 = vmatpush1.bf16.msra.mxu0 0
        %1337 = vmatprep.subr.bf16.mxu0 0
        %1338 = vmatpush1.bf16.msra.mxu0 0
        %1339 = vmatprep.subr.bf16.mxu0 0
        %1340 = vmatpush1.bf16.msra.mxu0 0
        %1341 = vmatprep.subr.bf16.mxu0 0
        %1342 = vmatpush1.bf16.msra.mxu0 0
        %1343 = vmatprep.subr.bf16.mxu0 0
        %1344 = vmatpush1.bf16.msra.mxu0 0
        %1345 = vmatprep.subr.bf16.mxu0 %v796
        %1346 = vmatpush1.bf16.msra.mxu0 %v793
        %1347 = vmatprep.subr.bf16.mxu0 %v606
        %1348 = vmatpush1.bf16.msra.mxu0 %v605
        %1349 = vmatprep.subr.bf16.mxu0 %v573
        %1350 = vmatpush1.bf16.msra.mxu0 %v572
        %1351 = vmatprep.subr.bf16.mxu0 0
        %1352 = vmatpush2.bf16.msra.mxu0 0
        %1353 = vmatprep.subr.bf16.mxu0 0
        %1354 = vmatpush2.bf16.msra.mxu0 0
        %1355 = vmatprep.subr.bf16.mxu0 0
        %1356 = vmatpush2.bf16.msra.mxu0 0
        %1357 = vmatprep.subr.bf16.mxu0 0
        %1358 = vmatpush2.bf16.msra.mxu0 0
        %1359 = vmatprep.subr.bf16.mxu0 0
        %1360 = vmatpush2.bf16.msra.mxu0 0
        %1361 = vmatprep.subr.bf16.mxu0 0
        %1362 = vmatpush2.bf16.msra.mxu0 0
        %1363 = vmatprep.subr.bf16.mxu0 0
        %1364 = vmatpush2.bf16.msra.mxu0 0
        %1365 = vmatprep.subr.bf16.mxu0 0
        %1366 = vmatpush2.bf16.msra.mxu0 0
        %1367 = vmatprep.mubr.bf16.mxu0 0
        %1368 = vmatmul.mubr.bf16.gmra.mxu0 %v715
        %v1369 = vpop.f32.mrf.mxu0
        %v1370 = vadd.f32 0.0, %v1369
        %v1371 = vpop.f32.mrf.mxu0
        %v1372 = vadd.f32 0.0, %v1371
        %v1373 = vpop.f32.mrf.mxu0
        %v1374 = vadd.f32 0.0, %v1373
        %v1375 = vpop.f32.mrf.mxu0
        %v1376 = vadd.f32 0.0, %v1375
        %1377 = vdwg.mxu0
        %1378 = vmatprep.subr.bf16.mxu0 0
        %1379 = vmatpush1.bf16.msra.mxu0 0
        %1380 = vmatprep.subr.bf16.mxu0 0
        %1381 = vmatpush1.bf16.msra.mxu0 0
        %1382 = vmatprep.subr.bf16.mxu0 0
        %1383 = vmatpush1.bf16.msra.mxu0 0
        %1384 = vmatprep.subr.bf16.mxu0 0
        %1385 = vmatpush1.bf16.msra.mxu0 0
        %1386 = vmatprep.subr.bf16.mxu0 0
        %1387 = vmatpush1.bf16.msra.mxu0 0
        %1388 = vmatprep.subr.bf16.mxu0 %v802
        %1389 = vmatpush1.bf16.msra.mxu0 %v799
        %1390 = vmatprep.subr.bf16.mxu0 %v608
        %1391 = vmatpush1.bf16.msra.mxu0 %v607
        %1392 = vmatprep.subr.bf16.mxu0 %v575
        %1393 = vmatpush1.bf16.msra.mxu0 %v574
        %1394 = vmatprep.subr.bf16.mxu0 0
        %1395 = vmatpush2.bf16.msra.mxu0 0
        %1396 = vmatprep.subr.bf16.mxu0 0
        %1397 = vmatpush2.bf16.msra.mxu0 0
        %1398 = vmatprep.subr.bf16.mxu0 0
        %1399 = vmatpush2.bf16.msra.mxu0 0
        %1400 = vmatprep.subr.bf16.mxu0 0
        %1401 = vmatpush2.bf16.msra.mxu0 0
        %1402 = vmatprep.subr.bf16.mxu0 0
        %1403 = vmatpush2.bf16.msra.mxu0 0
        %1404 = vmatprep.subr.bf16.mxu0 0
        %1405 = vmatpush2.bf16.msra.mxu0 0
        %1406 = vmatprep.subr.bf16.mxu0 0
        %1407 = vmatpush2.bf16.msra.mxu0 0
        %1408 = vmatprep.subr.bf16.mxu0 0
        %1409 = vmatpush2.bf16.msra.mxu0 0
        %1410 = vmatprep.mubr.bf16.mxu0 0
        %1411 = vmatmul.mubr.bf16.gmra.mxu0 %v715
        %v1412 = vpop.f32.mrf.mxu0
        %v1413 = vadd.f32 0.0, %v1412
        %v1414 = vpop.f32.mrf.mxu0
        %v1415 = vadd.f32 0.0, %v1414
        %v1416 = vpop.f32.mrf.mxu0
        %v1417 = vadd.f32 0.0, %v1416
        %v1418 = vpop.f32.mrf.mxu0
        %v1419 = vadd.f32 0.0, %v1418
        %1420 = vdwg.mxu0
        %1421 = vmatprep.subr.bf16.mxu0 0
        %1422 = vmatpush1.bf16.msra.mxu0 0
        %1423 = vmatprep.subr.bf16.mxu0 0
        %1424 = vmatpush1.bf16.msra.mxu0 0
        %1425 = vmatprep.subr.bf16.mxu0 0
        %1426 = vmatpush1.bf16.msra.mxu0 0
        %1427 = vmatprep.subr.bf16.mxu0 0
        %1428 = vmatpush1.bf16.msra.mxu0 0
        %1429 = vmatprep.subr.bf16.mxu0 0
        %1430 = vmatpush1.bf16.msra.mxu0 0
        %1431 = vmatprep.subr.bf16.mxu0 %v808
        %1432 = vmatpush1.bf16.msra.mxu0 %v805
        %1433 = vmatprep.subr.bf16.mxu0 %v610
        %1434 = vmatpush1.bf16.msra.mxu0 %v609
        %1435 = vmatprep.subr.bf16.mxu0 %v577
        %1436 = vmatpush1.bf16.msra.mxu0 %v576
        %1437 = vmatprep.subr.bf16.mxu0 0
        %1438 = vmatpush2.bf16.msra.mxu0 0
        %1439 = vmatprep.subr.bf16.mxu0 0
        %1440 = vmatpush2.bf16.msra.mxu0 0
        %1441 = vmatprep.subr.bf16.mxu0 0
        %1442 = vmatpush2.bf16.msra.mxu0 0
        %1443 = vmatprep.subr.bf16.mxu0 0
        %1444 = vmatpush2.bf16.msra.mxu0 0
        %1445 = vmatprep.subr.bf16.mxu0 0
        %1446 = vmatpush2.bf16.msra.mxu0 0
        %1447 = vmatprep.subr.bf16.mxu0 0
        %1448 = vmatpush2.bf16.msra.mxu0 0
        %1449 = vmatprep.subr.bf16.mxu0 0
        %1450 = vmatpush2.bf16.msra.mxu0 0
        %1451 = vmatprep.subr.bf16.mxu0 0
        %1452 = vmatpush2.bf16.msra.mxu0 0
        %1453 = vmatprep.mubr.bf16.mxu0 0
        %1454 = vmatmul.mubr.bf16.gmra.mxu0 %v715
        %v1455 = vpop.f32.mrf.mxu0
        %v1456 = vadd.f32 0.0, %v1455
        %v1457 = vpop.f32.mrf.mxu0
        %v1458 = vadd.f32 0.0, %v1457
        %v1459 = vpop.f32.mrf.mxu0
        %v1460 = vadd.f32 0.0, %v1459
        %v1461 = vpop.f32.mrf.mxu0
        %v1462 = vadd.f32 0.0, %v1461
        %1463 = vdwg.mxu0
        %1464 = vmatprep.subr.bf16.mxu0 0
        %1465 = vmatpush1.bf16.msra.mxu0 0
        %1466 = vmatprep.subr.bf16.mxu0 0
        %1467 = vmatpush1.bf16.msra.mxu0 0
        %1468 = vmatprep.subr.bf16.mxu0 0
        %1469 = vmatpush1.bf16.msra.mxu0 0
        %1470 = vmatprep.subr.bf16.mxu0 0
        %1471 = vmatpush1.bf16.msra.mxu0 0
        %1472 = vmatprep.subr.bf16.mxu0 0
        %1473 = vmatpush1.bf16.msra.mxu0 0
        %1474 = vmatprep.subr.bf16.mxu0 %v814
        %1475 = vmatpush1.bf16.msra.mxu0 %v811
        %1476 = vmatprep.subr.bf16.mxu0 %v612
        %1477 = vmatpush1.bf16.msra.mxu0 %v611
        %1478 = vmatprep.subr.bf16.mxu0 %v579
        %1479 = vmatpush1.bf16.msra.mxu0 %v578
        %1480 = vmatprep.subr.bf16.mxu0 0
        %1481 = vmatpush2.bf16.msra.mxu0 0
        %1482 = vmatprep.subr.bf16.mxu0 0
        %1483 = vmatpush2.bf16.msra.mxu0 0
        %1484 = vmatprep.subr.bf16.mxu0 0
        %1485 = vmatpush2.bf16.msra.mxu0 0
        %1486 = vmatprep.subr.bf16.mxu0 0
        %1487 = vmatpush2.bf16.msra.mxu0 0
        %1488 = vmatprep.subr.bf16.mxu0 0
        %1489 = vmatpush2.bf16.msra.mxu0 0
        %1490 = vmatprep.subr.bf16.mxu0 0
        %1491 = vmatpush2.bf16.msra.mxu0 0
        %1492 = vmatprep.subr.bf16.mxu0 0
        %1493 = vmatpush2.bf16.msra.mxu0 0
        %1494 = vmatprep.subr.bf16.mxu0 0
        %1495 = vmatpush2.bf16.msra.mxu0 0
        %1496 = vmatprep.mubr.bf16.mxu0 0
        %1497 = vmatmul.mubr.bf16.gmra.mxu0 %v715
        %v1498 = vpop.f32.mrf.mxu0
        %v1499 = vadd.f32 0.0, %v1498
        %v1500 = vpop.f32.mrf.mxu0
        %v1501 = vadd.f32 0.0, %v1500
        %v1502 = vpop.f32.mrf.mxu0
        %v1503 = vadd.f32 0.0, %v1502
        %v1504 = vpop.f32.mrf.mxu0
        %v1505 = vadd.f32 0.0, %v1504
        %1506 = vdwg.mxu0
        %1507 = vmatprep.subr.bf16.mxu0 0
        %1508 = vmatpush1.bf16.msra.mxu0 0
        %1509 = vmatprep.subr.bf16.mxu0 0
        %1510 = vmatpush1.bf16.msra.mxu0 0
        %1511 = vmatprep.subr.bf16.mxu0 0
        %1512 = vmatpush1.bf16.msra.mxu0 0
        %1513 = vmatprep.subr.bf16.mxu0 0
        %1514 = vmatpush1.bf16.msra.mxu0 0
        %1515 = vmatprep.subr.bf16.mxu0 0
        %1516 = vmatpush1.bf16.msra.mxu0 0
        %1517 = vmatprep.subr.bf16.mxu0 0
        %1518 = vmatpush1.bf16.msra.mxu0 %v817
        %1519 = vmatprep.subr.bf16.mxu0 0
        %1520 = vmatpush1.bf16.msra.mxu0 %v613
        %1521 = vmatprep.subr.bf16.mxu0 0
        %1522 = vmatpush1.bf16.msra.mxu0 %v580
        %1523 = vmatprep.subr.bf16.mxu0 0
        %1524 = vmatpush2.bf16.msra.mxu0 0
        %1525 = vmatprep.subr.bf16.mxu0 0
        %1526 = vmatpush2.bf16.msra.mxu0 0
        %1527 = vmatprep.subr.bf16.mxu0 0
        %1528 = vmatpush2.bf16.msra.mxu0 0
        %1529 = vmatprep.subr.bf16.mxu0 0
        %1530 = vmatpush2.bf16.msra.mxu0 0
        %1531 = vmatprep.subr.bf16.mxu0 0
        %1532 = vmatpush2.bf16.msra.mxu0 0
        %1533 = vmatprep.subr.bf16.mxu0 0
        %1534 = vmatpush2.bf16.msra.mxu0 0
        %1535 = vmatprep.subr.bf16.mxu0 0
        %1536 = vmatpush2.bf16.msra.mxu0 0
        %1537 = vmatprep.subr.bf16.mxu0 0
        %1538 = vmatpush2.bf16.msra.mxu0 0
        %1539 = vmatprep.mubr.bf16.mxu0 0
        %1540 = vmatmul.mubr.bf16.gmra.mxu0 %v715
        %v1541 = vpop.f32.mrf.mxu0
        %v1542 = vadd.f32 0.0, %v1541
        %v1543 = vpop.f32.mrf.mxu0
        %v1544 = vpop.f32.mrf.mxu0
        %v1545 = vadd.f32 0.0, %v1544
        %v1546 = vpop.f32.mrf.mxu0
        %1547 = vdwg.mxu0
        %v1548 = vld [vmem:[%s206] sm:$0xff]
        %v1549 = vld [vmem:[%s206 + $0x8] sm:$0xff]
        %1551 = vset.pattern.permute.xlu0 0
        %1552 = vperm.xlu0 %1551, %v1548
        %v1553 = vpop.permute.xlu0 %1552
        %1556 = vset.pattern.permute.xlu0 0
        %1557 = vperm.xlu0 %1556, %v1549
        %v1558 = vpop.permute.xlu0 %1557
        %v1560 = vmul.f32 %v854, %v1553
        %v1561 = vmul.f32 %v858, %v1558
        %v1562 = vadd.f32 %v1542, %v1560
        %v1563 = vadd.f32 %v1545, %v1561
        %1564 = vset.pattern.permute.xlu0 1
        %1565 = vperm.xlu0 %1564, %v1548
        %v1566 = vpop.permute.xlu0 %1565
        %1568 = vset.pattern.permute.xlu0 1
        %1569 = vperm.xlu0 %1568, %v1549
        %v1570 = vpop.permute.xlu0 %1569
        %v1572 = vmul.f32 %v856, %v1566
        %v1573 = vmul.f32 %v860, %v1570
        %v1574 = vadd.f32 %v1562, %v1572
        %v1575 = vadd.f32 %v1563, %v1573
        %1576 = vset.pattern.permute.xlu0 2
        %1577 = vperm.xlu0 %1576, %v1548
        %v1578 = vpop.permute.xlu0 %1577
        %1580 = vset.pattern.permute.xlu0 2
        %1581 = vperm.xlu0 %1580, %v1549
        %v1582 = vpop.permute.xlu0 %1581
        %v1584 = vmul.f32 %v897, %v1578
        %v1585 = vmul.f32 %v901, %v1582
        %v1586 = vadd.f32 %v1574, %v1584
        %v1587 = vadd.f32 %v1575, %v1585
        %1588 = vset.pattern.permute.xlu0 3
        %1589 = vperm.xlu0 %1588, %v1548
        %v1590 = vpop.permute.xlu0 %1589
        %1592 = vset.pattern.permute.xlu0 3
        %1593 = vperm.xlu0 %1592, %v1549
        %v1594 = vpop.permute.xlu0 %1593
        %v1596 = vmul.f32 %v899, %v1590
        %v1597 = vmul.f32 %v903, %v1594
        %v1598 = vadd.f32 %v1586, %v1596
        %v1599 = vadd.f32 %v1587, %v1597
        %1600 = vset.pattern.permute.xlu0 4
        %1601 = vperm.xlu0 %1600, %v1548
        %v1602 = vpop.permute.xlu0 %1601
        %1604 = vset.pattern.permute.xlu0 4
        %1605 = vperm.xlu0 %1604, %v1549
        %v1606 = vpop.permute.xlu0 %1605
        %v1608 = vmul.f32 %v940, %v1602
        %v1609 = vmul.f32 %v944, %v1606
        %v1610 = vadd.f32 %v1598, %v1608
        %v1611 = vadd.f32 %v1599, %v1609
        %1612 = vset.pattern.permute.xlu0 5
        %1613 = vperm.xlu0 %1612, %v1548
        %v1614 = vpop.permute.xlu0 %1613
        %1616 = vset.pattern.permute.xlu0 5
        %1617 = vperm.xlu0 %1616, %v1549
        %v1618 = vpop.permute.xlu0 %1617
        %v1620 = vmul.f32 %v942, %v1614
        %v1621 = vmul.f32 %v946, %v1618
        %v1622 = vadd.f32 %v1610, %v1620
        %v1623 = vadd.f32 %v1611, %v1621
        %1624 = vset.pattern.permute.xlu0 6
        %1625 = vperm.xlu0 %1624, %v1548
        %v1626 = vpop.permute.xlu0 %1625
        %1628 = vset.pattern.permute.xlu0 6
        %1629 = vperm.xlu0 %1628, %v1549
        %v1630 = vpop.permute.xlu0 %1629
        %v1632 = vmul.f32 %v983, %v1626
        %v1633 = vmul.f32 %v987, %v1630
        %v1634 = vadd.f32 %v1622, %v1632
        %v1635 = vadd.f32 %v1623, %v1633
        %1636 = vset.pattern.permute.xlu0 7
        %1637 = vperm.xlu0 %1636, %v1548
        %v1638 = vpop.permute.xlu0 %1637
        %1640 = vset.pattern.permute.xlu0 7
        %1641 = vperm.xlu0 %1640, %v1549
        %v1642 = vpop.permute.xlu0 %1641
        %v1644 = vmul.f32 %v985, %v1638
        %v1645 = vmul.f32 %v989, %v1642
        %v1646 = vadd.f32 %v1634, %v1644
        %v1647 = vadd.f32 %v1635, %v1645
        %1648 = vset.pattern.permute.xlu0 8
        %1649 = vperm.xlu0 %1648, %v1548
        %v1650 = vpop.permute.xlu0 %1649
        %1652 = vset.pattern.permute.xlu0 8
        %1653 = vperm.xlu0 %1652, %v1549
        %v1654 = vpop.permute.xlu0 %1653
        %v1656 = vmul.f32 %v1026, %v1650
        %v1657 = vmul.f32 %v1030, %v1654
        %v1658 = vadd.f32 %v1646, %v1656
        %v1659 = vadd.f32 %v1647, %v1657
        %1660 = vset.pattern.permute.xlu0 9
        %1661 = vperm.xlu0 %1660, %v1548
        %v1662 = vpop.permute.xlu0 %1661
        %1664 = vset.pattern.permute.xlu0 9
        %1665 = vperm.xlu0 %1664, %v1549
        %v1666 = vpop.permute.xlu0 %1665
        %v1668 = vmul.f32 %v1028, %v1662
        %v1669 = vmul.f32 %v1032, %v1666
        %v1670 = vadd.f32 %v1658, %v1668
        %v1671 = vadd.f32 %v1659, %v1669
        %1672 = vset.pattern.permute.xlu0 10
        %1673 = vperm.xlu0 %1672, %v1548
        %v1674 = vpop.permute.xlu0 %1673
        %1676 = vset.pattern.permute.xlu0 10
        %1677 = vperm.xlu0 %1676, %v1549
        %v1678 = vpop.permute.xlu0 %1677
        %v1680 = vmul.f32 %v1069, %v1674
        %v1681 = vmul.f32 %v1073, %v1678
        %v1682 = vadd.f32 %v1670, %v1680
        %v1683 = vadd.f32 %v1671, %v1681
        %1684 = vset.pattern.permute.xlu0 11
        %1685 = vperm.xlu0 %1684, %v1548
        %v1686 = vpop.permute.xlu0 %1685
        %1688 = vset.pattern.permute.xlu0 11
        %1689 = vperm.xlu0 %1688, %v1549
        %v1690 = vpop.permute.xlu0 %1689
        %v1692 = vmul.f32 %v1071, %v1686
        %v1693 = vmul.f32 %v1075, %v1690
        %v1694 = vadd.f32 %v1682, %v1692
        %v1695 = vadd.f32 %v1683, %v1693
        %1696 = vset.pattern.permute.xlu0 12
        %1697 = vperm.xlu0 %1696, %v1548
        %v1698 = vpop.permute.xlu0 %1697
        %1700 = vset.pattern.permute.xlu0 12
        %1701 = vperm.xlu0 %1700, %v1549
        %v1702 = vpop.permute.xlu0 %1701
        %v1704 = vmul.f32 %v1112, %v1698
        %v1705 = vmul.f32 %v1116, %v1702
        %v1706 = vadd.f32 %v1694, %v1704
        %v1707 = vadd.f32 %v1695, %v1705
        %1708 = vset.pattern.permute.xlu0 13
        %1709 = vperm.xlu0 %1708, %v1548
        %v1710 = vpop.permute.xlu0 %1709
        %1712 = vset.pattern.permute.xlu0 13
        %1713 = vperm.xlu0 %1712, %v1549
        %v1714 = vpop.permute.xlu0 %1713
        %v1716 = vmul.f32 %v1114, %v1710
        %v1717 = vmul.f32 %v1118, %v1714
        %v1718 = vadd.f32 %v1706, %v1716
        %v1719 = vadd.f32 %v1707, %v1717
        %1720 = vset.pattern.permute.xlu0 14
        %1721 = vperm.xlu0 %1720, %v1548
        %v1722 = vpop.permute.xlu0 %1721
        %1724 = vset.pattern.permute.xlu0 14
        %1725 = vperm.xlu0 %1724, %v1549
        %v1726 = vpop.permute.xlu0 %1725
        %v1728 = vmul.f32 %v1155, %v1722
        %v1729 = vmul.f32 %v1159, %v1726
        %v1730 = vadd.f32 %v1718, %v1728
        %v1731 = vadd.f32 %v1719, %v1729
        %1732 = vset.pattern.permute.xlu0 15
        %1733 = vperm.xlu0 %1732, %v1548
        %v1734 = vpop.permute.xlu0 %1733
        %1736 = vset.pattern.permute.xlu0 15
        %1737 = vperm.xlu0 %1736, %v1549
        %v1738 = vpop.permute.xlu0 %1737
        %v1740 = vmul.f32 %v1157, %v1734
        %v1741 = vmul.f32 %v1161, %v1738
        %v1742 = vadd.f32 %v1730, %v1740
        %v1743 = vadd.f32 %v1731, %v1741
        %1744 = vset.pattern.permute.xlu0 16
        %1745 = vperm.xlu0 %1744, %v1548
        %v1746 = vpop.permute.xlu0 %1745
        %1748 = vset.pattern.permute.xlu0 16
        %1749 = vperm.xlu0 %1748, %v1549
        %v1750 = vpop.permute.xlu0 %1749
        %v1752 = vmul.f32 %v1198, %v1746
        %v1753 = vmul.f32 %v1202, %v1750
        %v1754 = vadd.f32 %v1742, %v1752
        %v1755 = vadd.f32 %v1743, %v1753
        %1756 = vset.pattern.permute.xlu0 17
        %1757 = vperm.xlu0 %1756, %v1548
        %v1758 = vpop.permute.xlu0 %1757
        %1760 = vset.pattern.permute.xlu0 17
        %1761 = vperm.xlu0 %1760, %v1549
        %v1762 = vpop.permute.xlu0 %1761
        %v1764 = vmul.f32 %v1200, %v1758
        %v1765 = vmul.f32 %v1204, %v1762
        %v1766 = vadd.f32 %v1754, %v1764
        %v1767 = vadd.f32 %v1755, %v1765
        %1768 = vset.pattern.permute.xlu0 18
        %1769 = vperm.xlu0 %1768, %v1548
        %v1770 = vpop.permute.xlu0 %1769
        %1772 = vset.pattern.permute.xlu0 18
        %1773 = vperm.xlu0 %1772, %v1549
        %v1774 = vpop.permute.xlu0 %1773
        %v1776 = vmul.f32 %v1241, %v1770
        %v1777 = vmul.f32 %v1245, %v1774
        %v1778 = vadd.f32 %v1766, %v1776
        %v1779 = vadd.f32 %v1767, %v1777
        %1780 = vset.pattern.permute.xlu0 19
        %1781 = vperm.xlu0 %1780, %v1548
        %v1782 = vpop.permute.xlu0 %1781
        %1784 = vset.pattern.permute.xlu0 19
        %1785 = vperm.xlu0 %1784, %v1549
        %v1786 = vpop.permute.xlu0 %1785
        %v1788 = vmul.f32 %v1243, %v1782
        %v1789 = vmul.f32 %v1247, %v1786
        %v1790 = vadd.f32 %v1778, %v1788
        %v1791 = vadd.f32 %v1779, %v1789
        %1792 = vset.pattern.permute.xlu0 20
        %1793 = vperm.xlu0 %1792, %v1548
        %v1794 = vpop.permute.xlu0 %1793
        %1796 = vset.pattern.permute.xlu0 20
        %1797 = vperm.xlu0 %1796, %v1549
        %v1798 = vpop.permute.xlu0 %1797
        %v1800 = vmul.f32 %v1284, %v1794
        %v1801 = vmul.f32 %v1288, %v1798
        %v1802 = vadd.f32 %v1790, %v1800
        %v1803 = vadd.f32 %v1791, %v1801
        %1804 = vset.pattern.permute.xlu0 21
        %1805 = vperm.xlu0 %1804, %v1548
        %v1806 = vpop.permute.xlu0 %1805
        %1808 = vset.pattern.permute.xlu0 21
        %1809 = vperm.xlu0 %1808, %v1549
        %v1810 = vpop.permute.xlu0 %1809
        %v1812 = vmul.f32 %v1286, %v1806
        %v1813 = vmul.f32 %v1290, %v1810
        %v1814 = vadd.f32 %v1802, %v1812
        %v1815 = vadd.f32 %v1803, %v1813
        %1816 = vset.pattern.permute.xlu0 22
        %1817 = vperm.xlu0 %1816, %v1548
        %v1818 = vpop.permute.xlu0 %1817
        %1820 = vset.pattern.permute.xlu0 22
        %1821 = vperm.xlu0 %1820, %v1549
        %v1822 = vpop.permute.xlu0 %1821
        %v1824 = vmul.f32 %v1327, %v1818
        %v1825 = vmul.f32 %v1331, %v1822
        %v1826 = vadd.f32 %v1814, %v1824
        %v1827 = vadd.f32 %v1815, %v1825
        %1828 = vset.pattern.permute.xlu0 23
        %1829 = vperm.xlu0 %1828, %v1548
        %v1830 = vpop.permute.xlu0 %1829
        %1832 = vset.pattern.permute.xlu0 23
        %1833 = vperm.xlu0 %1832, %v1549
        %v1834 = vpop.permute.xlu0 %1833
        %v1836 = vmul.f32 %v1329, %v1830
        %v1837 = vmul.f32 %v1333, %v1834
        %v1838 = vadd.f32 %v1826, %v1836
        %v1839 = vadd.f32 %v1827, %v1837
        %1840 = vset.pattern.permute.xlu0 24
        %1841 = vperm.xlu0 %1840, %v1548
        %v1842 = vpop.permute.xlu0 %1841
        %1844 = vset.pattern.permute.xlu0 24
        %1845 = vperm.xlu0 %1844, %v1549
        %v1846 = vpop.permute.xlu0 %1845
        %v1848 = vmul.f32 %v1370, %v1842
        %v1849 = vmul.f32 %v1374, %v1846
        %v1850 = vadd.f32 %v1838, %v1848
        %v1851 = vadd.f32 %v1839, %v1849
        %1852 = vset.pattern.permute.xlu0 25
        %1853 = vperm.xlu0 %1852, %v1548
        %v1854 = vpop.permute.xlu0 %1853
        %1856 = vset.pattern.permute.xlu0 25
        %1857 = vperm.xlu0 %1856, %v1549
        %v1858 = vpop.permute.xlu0 %1857
        %v1860 = vmul.f32 %v1372, %v1854
        %v1861 = vmul.f32 %v1376, %v1858
        %v1862 = vadd.f32 %v1850, %v1860
        %v1863 = vadd.f32 %v1851, %v1861
        %1864 = vset.pattern.permute.xlu0 26
        %1865 = vperm.xlu0 %1864, %v1548
        %v1866 = vpop.permute.xlu0 %1865
        %1868 = vset.pattern.permute.xlu0 26
        %1869 = vperm.xlu0 %1868, %v1549
        %v1870 = vpop.permute.xlu0 %1869
        %v1872 = vmul.f32 %v1413, %v1866
        %v1873 = vmul.f32 %v1417, %v1870
        %v1874 = vadd.f32 %v1862, %v1872
        %v1875 = vadd.f32 %v1863, %v1873
        %1876 = vset.pattern.permute.xlu0 27
        %1877 = vperm.xlu0 %1876, %v1548
        %v1878 = vpop.permute.xlu0 %1877
        %1880 = vset.pattern.permute.xlu0 27
        %1881 = vperm.xlu0 %1880, %v1549
        %v1882 = vpop.permute.xlu0 %1881
        %v1884 = vmul.f32 %v1415, %v1878
        %v1885 = vmul.f32 %v1419, %v1882
        %v1886 = vadd.f32 %v1874, %v1884
        %v1887 = vadd.f32 %v1875, %v1885
        %1888 = vset.pattern.permute.xlu0 28
        %1889 = vperm.xlu0 %1888, %v1548
        %v1890 = vpop.permute.xlu0 %1889
        %1892 = vset.pattern.permute.xlu0 28
        %1893 = vperm.xlu0 %1892, %v1549
        %v1894 = vpop.permute.xlu0 %1893
        %v1896 = vmul.f32 %v1456, %v1890
        %v1897 = vmul.f32 %v1460, %v1894
        %v1898 = vadd.f32 %v1886, %v1896
        %v1899 = vadd.f32 %v1887, %v1897
        %1900 = vset.pattern.permute.xlu0 29
        %1901 = vperm.xlu0 %1900, %v1548
        %v1902 = vpop.permute.xlu0 %1901
        %1904 = vset.pattern.permute.xlu0 29
        %1905 = vperm.xlu0 %1904, %v1549
        %v1906 = vpop.permute.xlu0 %1905
        %v1908 = vmul.f32 %v1458, %v1902
        %v1909 = vmul.f32 %v1462, %v1906
        %v1910 = vadd.f32 %v1898, %v1908
        %v1911 = vadd.f32 %v1899, %v1909
        %1912 = vset.pattern.permute.xlu0 30
        %1913 = vperm.xlu0 %1912, %v1548
        %v1914 = vpop.permute.xlu0 %1913
        %1916 = vset.pattern.permute.xlu0 30
        %1917 = vperm.xlu0 %1916, %v1549
        %v1918 = vpop.permute.xlu0 %1917
        %v1920 = vmul.f32 %v1499, %v1914
        %v1921 = vmul.f32 %v1503, %v1918
        %v1922 = vadd.f32 %v1910, %v1920
        %v1923 = vadd.f32 %v1911, %v1921
        %1924 = vset.pattern.permute.xlu0 31
        %1925 = vperm.xlu0 %1924, %v1548
        %v1926 = vpop.permute.xlu0 %1925
        %1928 = vset.pattern.permute.xlu0 31
        %1929 = vperm.xlu0 %1928, %v1549
        %v1930 = vpop.permute.xlu0 %1929
        %v1932 = vmul.f32 %v1501, %v1926
        %v1933 = vmul.f32 %v1505, %v1930
        %v1934 = vadd.f32 %v1922, %v1932
        %v1935 = vadd.f32 %v1923, %v1933
        %1936 = vst [vmem:[%s195] sm:$0xff] %v1934
        %1937 = vst [vmem:[%s195 + $0x8] sm:$0xff] %v1935
        %s1938 = sand.u32 %s99, 1
        %s1939 = scalar_lea.sflag [#allocation4], %s1938
        %s1940 = sand.u32 %s99, 1
        %s1941 = smul.addr %s1940, 16
        %s1942 = scalar_lea.vmem [#allocation5], %s1941
        // Predicated region
        $region37: #{tpu_custom_call.1} parent=31 // pred_check
          %p1943 = pneg %p109
        $region38: #{tpu_custom_call.1} parent=31 // pred_check_branch
          %1945 = sbr.rel (%p1943) target = $region40
        $region39: #{tpu_custom_call.1} parent=31 // pred_region
          %s1946 = smul.u32 2, %s18
          %s1948 = ssub.s32 256, 256
          %1949 = vsyncadd %s1939, %s1948
          %s1950 = smul.addr %s1946, 128
          %s1951 = scalar_lea.hbm %s3, %s1950
          %s1952 = sshll.u32 %s1942, 4
          %s1953 = int_to_ptr.vmem [resolvable:$true] %s1952
          %1958 = dma.vmem_to_hbm [thread:$0]  %s1953, 256, %s1951, %s1939, 128, 128, 8
        $region40: #{tpu_custom_call.1} parent=31 // pred_fallthru
          _
      $region32: #{tpu_custom_call.1} parent=5 // pred_fallthru
        _
      %p1959 = scmp.le.s32.totalorder 2, %s13
      // Predicated region
      $region41: #{tpu_custom_call.1} parent=5 // pred_check
        %p1960 = pneg %p1959
      $region42: #{tpu_custom_call.1} parent=5 // pred_check_branch
        %1962 = sbr.rel (%p1960) target = $region44
      $region43: #{tpu_custom_call.1} parent=5 // pred_region
        %s1963 = ssub.s32 %s13, 2
        // Predicated region
        $region45: #{tpu_custom_call.1} parent=43 // pred_check
          %p1964 = pneg %p115
        $region46: #{tpu_custom_call.1} parent=43 // pred_check_branch
          %1966 = sbr.rel (%p1964) target = $region48
        $region47: #{tpu_custom_call.1} parent=43 // pred_region
          %s1967 = sand.u32 %s100, 1
          %s1968 = scalar_lea.sflag [#allocation4], %s1967
          %s1969 = sand.u32 %s100, 1
          %s1970 = smul.addr %s1969, 16
          %s1971 = scalar_lea.vmem [#allocation5], %s1970
          %1972 = dma.done %s1968, 256
        $region48: #{tpu_custom_call.1} parent=43 // pred_fallthru
          _
      $region44: #{tpu_custom_call.1} parent=5 // pred_fallthru
        _
    $region6: #{tpu_custom_call.1} parent=1 // loop_footer
      %s17 = sadd.s32 1, %s13
    $region7: #{tpu_custom_call.1} parent=1 // loop_footer_branch
      %12 = sbr.rel target = $region3
    $region8: #{tpu_custom_call.1} parent=1 // loop_exit
      _
    %1973 = vsyncpa [#allocation3], 1
    %s1974 = scalar_lea.sflag [#allocation3], 1
    %1975 = vsyncpa %s1974, 1
    %1976 = vsyncpa [#allocation4], 1
    %s1977 = scalar_lea.sflag [#allocation4], 1
    %1978 = vsyncpa %s1977, 1

</llo_original>
